<compile_context>
chip_gen: v6e
topology: v6e:2x2x1
jax: 0.10.0
libtpu: 0.0.40
codegen_flags: <defaults>
</compile_context>

<pallas_src>
import jax
import jax.numpy as jnp
from jax import lax
from jax.experimental import pallas as pl
from jax.experimental.pallas import tpu as pltpu


def _round_up(v, m):
    return ((v + m - 1) // m) * m


def _pad2(a, rows, cols):
    r, c = a.shape
    return jnp.pad(a, ((0, rows - r), (0, cols - c)))


def _node_model_kernel(row_ref, col_ref,                       # per-tile index blocks
                       x_ref, ea_ref, inv_ref,                 # resident / tiled inputs
                       w1x_ref, w1e_ref, b1_ref,
                       w2x_ref, w2m_ref, b2_ref,
                       out_ref,                                # output (resident)
                       acc_ref, xw1_ref):                      # VMEM scratch
    e = pl.program_id(0)
    tile_e = ea_ref.shape[0]
    n_pad = x_ref.shape[0]

    @pl.when(e == 0)
    def _():
        acc_ref[...] = jnp.zeros_like(acc_ref)
        # Hoist x @ W1_x out of the per-edge stream: x[row] @ W1_x ==
        # onehot(row) @ (x @ W1_x), so compute x @ W1_x exactly once.
        xw1_ref[...] = jnp.dot(x_ref[...], w1x_ref[...],
                               preferred_element_type=jnp.float32)

    # ---- gather one-hot [tile_e, n_pad] (MXU-driven gather) -------------------
    # Padded edges carry a sentinel row index == n_pad, so their one-hot row is
    # all zeros and they contribute nothing (no masking needed anywhere).
    row_v = row_ref[...]                                       # [tile_e, 1] i32
    oh_gather = (lax.broadcasted_iota(jnp.int32, (tile_e, n_pad), 1)
                 == row_v).astype(jnp.float32)

    # ---- per-edge MLP1: two MXU passes per tile -------------------------------
    h1 = (jnp.dot(oh_gather, xw1_ref[...], preferred_element_type=jnp.float32)
          + jnp.dot(ea_ref[...], w1e_ref[...], preferred_element_type=jnp.float32)
          + b1_ref[...])
    h1 = jnp.maximum(h1, 0.0)

    # ---- scatter-add by col as one MXU pass: acc += onehot(col)^T @ h1 --------
    # Sentinel col index == n_pad -> all-zero column -> padded edges neutral.
    col_v = col_ref[...]                                       # [1, tile_e] i32
    oh_scatter_t = (lax.broadcasted_iota(jnp.int32, (n_pad, tile_e), 0)
                    == col_v).astype(jnp.float32)
    acc_ref[...] += jnp.dot(oh_scatter_t, h1, preferred_element_type=jnp.float32)

    # ---- finalize on the last edge tile: mean + per-node MLP2 -----------------
    @pl.when(e == pl.num_programs(0) - 1)
    def _():
        mean = acc_ref[...] * inv_ref[...]                     # [n_pad,gnn_hp]*[n_pad,1]
        h2 = (jnp.dot(x_ref[...], w2x_ref[...], preferred_element_type=jnp.float32)
              + jnp.dot(mean, w2m_ref[...], preferred_element_type=jnp.float32)
              + b2_ref[...])
        out_ref[...] = jnp.maximum(h2, 0.0)


def node_model(x, edge_index, edge_attr, params, *, tile_e=512):
    """x: [N, node_h] f32, edge_index: [2, E] int32, edge_attr: [E, edge_h] f32."""
    N, node_h = x.shape
    E, edge_h = edge_attr.shape
    gnn_h = params["w1"].shape[1]

    LANE, SUB = 128, 8
    node_hp = _round_up(node_h, LANE)
    edge_hp = _round_up(edge_h, LANE)
    gnn_hp = _round_up(gnn_h, LANE)
    n_pad = _round_up(N, SUB)

    # Edge-tile size: one (8-aligned) tile if all edges fit, otherwise a
    # 128-aligned tile so the [1, tile_e] col block stays lane-dense.
    tile_e = int(tile_e)
    if E > tile_e:
        tile_e = _round_up(tile_e, LANE)
    else:
        tile_e = _round_up(max(E, 1), SUB)
    e_pad = _round_up(max(E, 1), tile_e)
    n_tiles = e_pad // tile_e

    row = edge_index[0].astype(jnp.int32)
    col = edge_index[1].astype(jnp.int32)
    # Sentinel index n_pad for padded edges -> all-zero one-hot rows/columns.
    row_p = jnp.pad(row, (0, e_pad - E), constant_values=n_pad).reshape(e_pad, 1)
    col_p = jnp.pad(col, (0, e_pad - E), constant_values=n_pad).reshape(1, e_pad)

    # Exact per-node inverse counts for the scatter-mean (computed in the glue).
    cnt = jax.ops.segment_sum(jnp.ones((E,), jnp.float32), col, num_segments=N)
    inv_cnt = (1.0 / jnp.maximum(cnt, 1.0)).reshape(N, 1)

    # Lane-dense zero-padding of activations / weights (results unchanged).
    x_p = _pad2(x.astype(jnp.float32), n_pad, node_hp)
    ea_p = _pad2(edge_attr.astype(jnp.float32), e_pad, edge_hp)
    inv_p = _pad2(inv_cnt, n_pad, 1)

    w1x = _pad2(params["w1"][:node_h], node_hp, gnn_hp)
    w1e = _pad2(params["w1"][node_h:], edge_hp, gnn_hp)
    b1 = _pad2(params["b1"].reshape(1, gnn_h), 1, gnn_hp)
    w2x = _pad2(params["w2"][:node_h], node_hp, gnn_hp)
    w2m = _pad2(params["w2"][node_h:], gnn_hp, gnn_hp)
    b2 = _pad2(params["b2"].reshape(1, gnn_h), 1, gnn_hp)

    # VMEM budget: ~75% of physical (≈96 MiB on v5e/v6e, ≈48 MiB on v7x).
    try:
        vmem_cap = int(pltpu.get_tpu_info().vmem_capacity_bytes)
    except Exception:
        vmem_cap = 64 * 1024 * 1024
    vmem_limit = max(32 * 1024 * 1024, min(vmem_cap * 3 // 4, 112 * 1024 * 1024))

    grid_spec = pltpu.PrefetchScalarGridSpec(
        num_scalar_prefetch=0,
        grid=(n_tiles,),                                        # edge-tile reduction axis
        in_specs=[
            pl.BlockSpec((tile_e, 1), lambda e: (e, 0)),        # row indices (tile)
            pl.BlockSpec((1, tile_e), lambda e: (0, e)),        # col indices (tile)
            pl.BlockSpec((n_pad, node_hp), lambda e: (0, 0)),   # x (resident)
            pl.BlockSpec((tile_e, edge_hp), lambda e: (e, 0)),  # edge_attr tile
            pl.BlockSpec((n_pad, 1), lambda e: (0, 0)),         # inverse counts
            pl.BlockSpec((node_hp, gnn_hp), lambda e: (0, 0)),  # w1x
            pl.BlockSpec((edge_hp, gnn_hp), lambda e: (0, 0)),  # w1e
            pl.BlockSpec((1, gnn_hp), lambda e: (0, 0)),        # b1
            pl.BlockSpec((node_hp, gnn_hp), lambda e: (0, 0)),  # w2x
            pl.BlockSpec((gnn_hp, gnn_hp), lambda e: (0, 0)),   # w2m
            pl.BlockSpec((1, gnn_hp), lambda e: (0, 0)),        # b2
        ],
        out_specs=pl.BlockSpec((n_pad, gnn_hp), lambda e: (0, 0)),
        scratch_shapes=[
            pltpu.VMEM((n_pad, gnn_hp), jnp.float32),   # node scatter accumulator
            pltpu.VMEM((n_pad, gnn_hp), jnp.float32),   # x @ W1_x (computed once)
        ],
    )

    out = pl.pallas_call(
        _node_model_kernel,
        out_shape=jax.ShapeDtypeStruct((n_pad, gnn_hp), jnp.float32),
        grid_spec=grid_spec,
        compiler_params=pltpu.CompilerParams(
            dimension_semantics=("arbitrary",),          # edge axis is a reduction
            vmem_limit_bytes=vmem_limit,
        ),
    )(row_p, col_p, x_p, ea_p, inv_p, w1x, w1e, b1, w2x, w2m, b2)

    # TODO(synk): for very large N (n_pad beyond a few thousand) additionally tile
    # the node axis (pre-bucket edges per node tile in the glue; mark that axis
    # "parallel" for megacore/v7x) instead of keeping full [n_pad, *] buffers
    # resident and building [*, n_pad] one-hots.
    return out[:N, :gnn_h]


def reference(x, edge_index, edge_attr, params):
    """Pure-JAX reference matching the PyTorch forward."""
    N = x.shape[0]
    row, col = edge_index[0], edge_index[1]
    out = jnp.concatenate([x[row], edge_attr], axis=1)
    out = jax.nn.relu(out @ params["w1"] + params["b1"])
    summed = jax.ops.segment_sum(out, col, num_segments=N)
    cnt = jax.ops.segment_sum(jnp.ones((out.shape[0],), x.dtype), col, num_segments=N)
    mean = summed / jnp.maximum(cnt, 1.0)[:, None]
    out = jnp.concatenate([x, mean], axis=1)
    return jax.nn.relu(out @ params["w2"] + params["b2"])


if __name__ == "__main__":
    node_h, edge_h, gnn_h = 8, 8, 16
    N, E = 24, 300          # E spans multiple 128-edge tiles -> exercises accumulation
                            # and sentinel-padded edges in the last tile

    key = jax.random.PRNGKey(0)
    kx, ke, kr, kc, k1, k2, k3, k4 = jax.random.split(key, 8)

    x = jax.random.normal(kx, (N, node_h), dtype=jnp.float32)
    edge_attr = jax.random.normal(ke, (E, edge_h), dtype=jnp.float32)
    row = jax.random.randint(kr, (E,), 0, N, dtype=jnp.int32)
    col = jax.random.randint(kc, (E,), 0, N, dtype=jnp.int32)
    edge_index = jnp.stack([row, col], axis=0)

    # deterministic parameter init (Linear weights stored as [in, out])
    params = {
        "w1": jax.random.normal(k1, (node_h + edge_h, gnn_h), dtype=jnp.float32) * 0.1,
        "b1": jax.random.normal(k2, (gnn_h,), dtype=jnp.float32) * 0.1,
        "w2": jax.random.normal(k3, (node_h + gnn_h, gnn_h), dtype=jnp.float32) * 0.1,
        "b2": jax.random.normal(k4, (gnn_h,), dtype=jnp.float32) * 0.1,
    }

    out = node_model(x, edge_index, edge_attr, params, tile_e=128)   # 3 edge tiles
    out = jax.block_until_ready(out)

    ref = reference(x, edge_index, edge_attr, params)
    assert out.shape == (N, gnn_h)
    assert jnp.allclose(out, ref, atol=1e-5, rtol=1e-5), float(jnp.max(jnp.abs(out - ref)))

    print("KERNEL_OK")
</pallas_src>

<mosaic_0001>
module attributes {stable_mosaic.version = 11 : i64} {
  func.func @_node_model_kernel(%arg0: i32, %arg1: memref<128x1xi32, #tpu.memory_space<vmem>>, %arg2: memref<1x128xi32, #tpu.memory_space<vmem>>, %arg3: memref<24x128xf32, #tpu.memory_space<vmem>>, %arg4: memref<128x128xf32, #tpu.memory_space<vmem>>, %arg5: memref<24x1xf32, #tpu.memory_space<vmem>>, %arg6: memref<128x128xf32, #tpu.memory_space<vmem>>, %arg7: memref<128x128xf32, #tpu.memory_space<vmem>>, %arg8: memref<1x128xf32, #tpu.memory_space<vmem>>, %arg9: memref<128x128xf32, #tpu.memory_space<vmem>>, %arg10: memref<128x128xf32, #tpu.memory_space<vmem>>, %arg11: memref<1x128xf32, #tpu.memory_space<vmem>>, %arg12: memref<24x128xf32, #tpu.memory_space<vmem>>, %arg13: memref<24x128xf32, #tpu.memory_space<vmem>>, %arg14: memref<24x128xf32, #tpu.memory_space<vmem>>) attributes {dimension_semantics = [#tpu.dimension_semantics<arbitrary>], iteration_bounds = array<i64: 3>, scalar_prefetch = 0 : i64, scratch_operands = 2 : i64, tpu.core_type = #tpu.core_type<tc>, window_params = [{transform_indices = @transform_0, window_bounds = array<i64: 128, 1>}, {transform_indices = @transform_1, window_bounds = array<i64: 1, 128>}, {pipeline_mode = #tpu.pipeline_mode<synchronous>, transform_indices = @transform_2, window_bounds = array<i64: 24, 128>}, {transform_indices = @transform_3, window_bounds = array<i64: 128, 128>}, {pipeline_mode = #tpu.pipeline_mode<synchronous>, transform_indices = @transform_4, window_bounds = array<i64: 24, 1>}, {pipeline_mode = #tpu.pipeline_mode<synchronous>, transform_indices = @transform_5, window_bounds = array<i64: 128, 128>}, {pipeline_mode = #tpu.pipeline_mode<synchronous>, transform_indices = @transform_6, window_bounds = array<i64: 128, 128>}, {pipeline_mode = #tpu.pipeline_mode<synchronous>, transform_indices = @transform_7, window_bounds = array<i64: 1, 128>}, {pipeline_mode = #tpu.pipeline_mode<synchronous>, transform_indices = @transform_8, window_bounds = array<i64: 128, 128>}, {pipeline_mode = #tpu.pipeline_mode<synchronous>, transform_indices = @transform_9, window_bounds = array<i64: 128, 128>}, {pipeline_mode = #tpu.pipeline_mode<synchronous>, transform_indices = @transform_10, window_bounds = array<i64: 1, 128>}, {pipeline_mode = #tpu.pipeline_mode<synchronous>, transform_indices = @transform_11, window_bounds = array<i64: 24, 128>}]} {
    %c0_i32 = arith.constant 0 : i32
    %0 = arith.cmpi eq, %arg0, %c0_i32 : i32
    %1 = arith.extui %0 : i1 to i32
    %c0_i32_0 = arith.constant 0 : i32
    %2 = arith.cmpi ne, %1, %c0_i32_0 : i32
    scf.if %2 {
      %cst_20 = arith.constant 0.000000e+00 : f32
      %33 = vector.broadcast %cst_20 : f32 to vector<24x128xf32>
      %c0_21 = arith.constant 0 : index
      %c0_22 = arith.constant 0 : index
      %34 = vector.load %arg13[%c0_21, %c0_22] : memref<24x128xf32, #tpu.memory_space<vmem>>, vector<24x128xf32>
      tpu.vector_store %arg13[%c0_21, %c0_22], %33 {strides = array<i32>} : memref<24x128xf32, #tpu.memory_space<vmem>>, vector<24x128xf32>,
      %c0_23 = arith.constant 0 : index
      %c0_24 = arith.constant 0 : index
      %35 = vector.load %arg3[%c0_23, %c0_24] : memref<24x128xf32, #tpu.memory_space<vmem>>, vector<24x128xf32>
      %c0_25 = arith.constant 0 : index
      %c0_26 = arith.constant 0 : index
      %36 = vector.load %arg6[%c0_25, %c0_26] : memref<128x128xf32, #tpu.memory_space<vmem>>, vector<128x128xf32>
      %cst_27 = arith.constant dense<0.000000e+00> : vector<24x128xf32>
      %37 = tpu.matmul %35, %36, %cst_27 {dimension_numbers = #tpu.dot_dimension_numbers<[1], [0], [0], [1], [0, 0, 1, 1], [], []>} : vector<24x128xf32>, vector<128x128xf32>, vector<24x128xf32> -> vector<24x128xf32>
      %c0_28 = arith.constant 0 : index
      %c0_29 = arith.constant 0 : index
      %38 = vector.load %arg14[%c0_28, %c0_29] : memref<24x128xf32, #tpu.memory_space<vmem>>, vector<24x128xf32>
      tpu.vector_store %arg14[%c0_28, %c0_29], %37 {strides = array<i32>} : memref<24x128xf32, #tpu.memory_space<vmem>>, vector<24x128xf32>,
    } else {
    }
    %c0 = arith.constant 0 : index
    %c0_1 = arith.constant 0 : index
    %3 = vector.load %arg1[%c0, %c0_1] : memref<128x1xi32, #tpu.memory_space<vmem>>, vector<128x1xi32>
    %4 = tpu.iota {dimensions = array<i32: 1>} : vector<128x24xi32>
    %5 = vector.broadcast %3 : vector<128x1xi32> to vector<128x24xi32>
    %6 = arith.cmpi eq, %4, %5 : vector<128x24xi32>
    %7 = arith.extui %6 : vector<128x24xi1> to vector<128x24xi32>
    %8 = arith.sitofp %7 : vector<128x24xi32> to vector<128x24xf32>
    %c0_2 = arith.constant 0 : index
    %c0_3 = arith.constant 0 : index
    %9 = vector.load %arg14[%c0_2, %c0_3] : memref<24x128xf32, #tpu.memory_space<vmem>>, vector<24x128xf32>
    %cst = arith.constant dense<0.000000e+00> : vector<128x128xf32>
    %10 = tpu.matmul %8, %9, %cst {dimension_numbers = #tpu.dot_dimension_numbers<[1], [0], [0], [1], [0, 0, 1, 1], [], []>} : vector<128x24xf32>, vector<24x128xf32>, vector<128x128xf32> -> vector<128x128xf32>
    %c0_4 = arith.constant 0 : index
    %c0_5 = arith.constant 0 : index
    %11 = vector.load %arg4[%c0_4, %c0_5] : memref<128x128xf32, #tpu.memory_space<vmem>>, vector<128x128xf32>
    %c0_6 = arith.constant 0 : index
    %c0_7 = arith.constant 0 : index
    %12 = vector.load %arg7[%c0_6, %c0_7] : memref<128x128xf32, #tpu.memory_space<vmem>>, vector<128x128xf32>
    %cst_8 = arith.constant dense<0.000000e+00> : vector<128x128xf32>
    %13 = tpu.matmul %11, %12, %cst_8 {dimension_numbers = #tpu.dot_dimension_numbers<[1], [0], [0], [1], [0, 0, 1, 1], [], []>} : vector<128x128xf32>, vector<128x128xf32>, vector<128x128xf32> -> vector<128x128xf32>
    %14 = arith.addf %10, %13 : vector<128x128xf32>
    %c0_9 = arith.constant 0 : index
    %c0_10 = arith.constant 0 : index
    %15 = vector.load %arg8[%c0_9, %c0_10] : memref<1x128xf32, #tpu.memory_space<vmem>>, vector<1x128xf32>
    %16 = vector.broadcast %15 : vector<1x128xf32> to vector<128x128xf32>
    %17 = arith.addf %14, %16 : vector<128x128xf32>
    %cst_11 = arith.constant 0.000000e+00 : f32
    %18 = vector.broadcast %cst_11 : f32 to vector<128x128xf32>
    %19 = arith.maximumf %17, %18 : vector<128x128xf32>
    %c0_12 = arith.constant 0 : index
    %c0_13 = arith.constant 0 : index
    %20 = vector.load %arg2[%c0_12, %c0_13] : memref<1x128xi32, #tpu.memory_space<vmem>>, vector<1x128xi32>
    %21 = tpu.iota {dimensions = array<i32: 0>} : vector<24x128xi32>
    %22 = vector.broadcast %20 : vector<1x128xi32> to vector<24x128xi32>
    %23 = arith.cmpi eq, %21, %22 : vector<24x128xi32>
    %24 = arith.extui %23 : vector<24x128xi1> to vector<24x128xi32>
    %25 = arith.sitofp %24 : vector<24x128xi32> to vector<24x128xf32>
    %c0_14 = arith.constant 0 : index
    %c0_15 = arith.constant 0 : index
    %26 = vector.load %arg13[%c0_14, %c0_15] : memref<24x128xf32, #tpu.memory_space<vmem>>, vector<24x128xf32>
    %cst_16 = arith.constant dense<0.000000e+00> : vector<24x128xf32>
    %27 = tpu.matmul %25, %19, %cst_16 {dimension_numbers = #tpu.dot_dimension_numbers<[1], [0], [0], [1], [0, 0, 1, 1], [], []>} : vector<24x128xf32>, vector<128x128xf32>, vector<24x128xf32> -> vector<24x128xf32>
    %28 = arith.addf %26, %27 : vector<24x128xf32>
    %c0_17 = arith.constant 0 : index
    %c0_18 = arith.constant 0 : index
    %29 = vector.load %arg13[%c0_17, %c0_18] : memref<24x128xf32, #tpu.memory_space<vmem>>, vector<24x128xf32>
    tpu.vector_store %arg13[%c0_17, %c0_18], %28 {strides = array<i32>} : memref<24x128xf32, #tpu.memory_space<vmem>>, vector<24x128xf32>,
    %c2_i32 = arith.constant 2 : i32
    %30 = arith.cmpi eq, %arg0, %c2_i32 : i32
    %31 = arith.extui %30 : i1 to i32
    %c0_i32_19 = arith.constant 0 : i32
    %32 = arith.cmpi ne, %31, %c0_i32_19 : i32
    scf.if %32 {
      %c0_20 = arith.constant 0 : index
      %c0_21 = arith.constant 0 : index
      %33 = vector.load %arg13[%c0_20, %c0_21] : memref<24x128xf32, #tpu.memory_space<vmem>>, vector<24x128xf32>
      %c0_22 = arith.constant 0 : index
      %c0_23 = arith.constant 0 : index
      %34 = vector.load %arg5[%c0_22, %c0_23] : memref<24x1xf32, #tpu.memory_space<vmem>>, vector<24x1xf32>
      %35 = vector.broadcast %34 : vector<24x1xf32> to vector<24x128xf32>
      %36 = arith.mulf %33, %35 : vector<24x128xf32>
      %c0_24 = arith.constant 0 : index
      %c0_25 = arith.constant 0 : index
      %37 = vector.load %arg3[%c0_24, %c0_25] : memref<24x128xf32, #tpu.memory_space<vmem>>, vector<24x128xf32>
      %c0_26 = arith.constant 0 : index
      %c0_27 = arith.constant 0 : index
      %38 = vector.load %arg9[%c0_26, %c0_27] : memref<128x128xf32, #tpu.memory_space<vmem>>, vector<128x128xf32>
      %cst_28 = arith.constant dense<0.000000e+00> : vector<24x128xf32>
      %39 = tpu.matmul %37, %38, %cst_28 {dimension_numbers = #tpu.dot_dimension_numbers<[1], [0], [0], [1], [0, 0, 1, 1], [], []>} : vector<24x128xf32>, vector<128x128xf32>, vector<24x128xf32> -> vector<24x128xf32>
      %c0_29 = arith.constant 0 : index
      %c0_30 = arith.constant 0 : index
      %40 = vector.load %arg10[%c0_29, %c0_30] : memref<128x128xf32, #tpu.memory_space<vmem>>, vector<128x128xf32>
      %cst_31 = arith.constant dense<0.000000e+00> : vector<24x128xf32>
      %41 = tpu.matmul %36, %40, %cst_31 {dimension_numbers = #tpu.dot_dimension_numbers<[1], [0], [0], [1], [0, 0, 1, 1], [], []>} : vector<24x128xf32>, vector<128x128xf32>, vector<24x128xf32> -> vector<24x128xf32>
      %42 = arith.addf %39, %41 : vector<24x128xf32>
      %c0_32 = arith.constant 0 : index
      %c0_33 = arith.constant 0 : index
      %43 = vector.load %arg11[%c0_32, %c0_33] : memref<1x128xf32, #tpu.memory_space<vmem>>, vector<1x128xf32>
      %44 = vector.broadcast %43 : vector<1x128xf32> to vector<24x128xf32>
      %45 = arith.addf %42, %44 : vector<24x128xf32>
      %cst_34 = arith.constant 0.000000e+00 : f32
      %46 = vector.broadcast %cst_34 : f32 to vector<24x128xf32>
      %47 = arith.maximumf %45, %46 : vector<24x128xf32>
      %c0_35 = arith.constant 0 : index
      %c0_36 = arith.constant 0 : index
      %48 = vector.load %arg12[%c0_35, %c0_36] : memref<24x128xf32, #tpu.memory_space<vmem>>, vector<24x128xf32>
      tpu.vector_store %arg12[%c0_35, %c0_36], %47 {strides = array<i32>} : memref<24x128xf32, #tpu.memory_space<vmem>>, vector<24x128xf32>,
    } else {
    }
    return
  }
  func.func @transform_0(%arg0: i32) -> (i32, i32) {
    %c0_i32 = arith.constant 0 : i32
    %c0_i32_0 = arith.constant 0 : i32
    return %arg0, %c0_i32 : i32, i32
  }
  func.func @transform_1(%arg0: i32) -> (i32, i32) {
    %c0_i32 = arith.constant 0 : i32
    %c0_i32_0 = arith.constant 0 : i32
    return %c0_i32, %arg0 : i32, i32
  }
  func.func @transform_2(%arg0: i32) -> (i32, i32) {
    %c0_i32 = arith.constant 0 : i32
    %c0_i32_0 = arith.constant 0 : i32
    %c0_i32_1 = arith.constant 0 : i32
    return %c0_i32, %c0_i32_0 : i32, i32
  }
  func.func @transform_3(%arg0: i32) -> (i32, i32) {
    %c0_i32 = arith.constant 0 : i32
    %c0_i32_0 = arith.constant 0 : i32
    return %arg0, %c0_i32 : i32, i32
  }
  func.func @transform_4(%arg0: i32) -> (i32, i32) {
    %c0_i32 = arith.constant 0 : i32
    %c0_i32_0 = arith.constant 0 : i32
    %c0_i32_1 = arith.constant 0 : i32
    return %c0_i32, %c0_i32_0 : i32, i32
  }
  func.func @transform_5(%arg0: i32) -> (i32, i32) {
    %c0_i32 = arith.constant 0 : i32
    %c0_i32_0 = arith.constant 0 : i32
    %c0_i32_1 = arith.constant 0 : i32
    return %c0_i32, %c0_i32_0 : i32, i32
  }
  func.func @transform_6(%arg0: i32) -> (i32, i32) {
    %c0_i32 = arith.constant 0 : i32
    %c0_i32_0 = arith.constant 0 : i32
    %c0_i32_1 = arith.constant 0 : i32
    return %c0_i32, %c0_i32_0 : i32, i32
  }
  func.func @transform_7(%arg0: i32) -> (i32, i32) {
    %c0_i32 = arith.constant 0 : i32
    %c0_i32_0 = arith.constant 0 : i32
    %c0_i32_1 = arith.constant 0 : i32
    return %c0_i32, %c0_i32_0 : i32, i32
  }
  func.func @transform_8(%arg0: i32) -> (i32, i32) {
    %c0_i32 = arith.constant 0 : i32
    %c0_i32_0 = arith.constant 0 : i32
    %c0_i32_1 = arith.constant 0 : i32
    return %c0_i32, %c0_i32_0 : i32, i32
  }
  func.func @transform_9(%arg0: i32) -> (i32, i32) {
    %c0_i32 = arith.constant 0 : i32
    %c0_i32_0 = arith.constant 0 : i32
    %c0_i32_1 = arith.constant 0 : i32
    return %c0_i32, %c0_i32_0 : i32, i32
  }
  func.func @transform_10(%arg0: i32) -> (i32, i32) {
    %c0_i32 = arith.constant 0 : i32
    %c0_i32_0 = arith.constant 0 : i32
    %c0_i32_1 = arith.constant 0 : i32
    return %c0_i32, %c0_i32_0 : i32, i32
  }
  func.func @transform_11(%arg0: i32) -> (i32, i32) {
    %c0_i32 = arith.constant 0 : i32
    %c0_i32_0 = arith.constant 0 : i32
    %c0_i32_1 = arith.constant 0 : i32
    return %c0_i32, %c0_i32_0 : i32, i32
  }
}

</mosaic_0001>

<llo_original>
// kernel: tpu_custom_call.1
$region0: #{tpu_custom_call.1}
  #allocation0 [shape = 'u32[]', space=smem, size = 0x4, offset = 0x4, fixed_abs, tag = 'smem constant byte address 0x4 - core index']
  #allocation1 [shape = 'u32[144,128]{1,0:T(1,128)}', space=vmem, size = 0x12000, scoped, tag = 'internal scratch']
  #allocation2 [shape = 'f32[24,128]{1,0:T(8,128)}', space=vmem, size = 0x3000, scoped, tag = 'scratch operand']
  #allocation3 [shape = 'f32[24,128]{1,0:T(8,128)}', space=vmem, size = 0x3000, scoped, tag = 'scratch operand']
  %s0 = inlined_call_operand.vmem [shape: s32[384,1], index: 0, kind: input, shape index: {}]
  %s1 = inlined_call_operand.vmem [shape: s32[1,384], index: 1, kind: input, shape index: {}]
  %s2 = inlined_call_operand.vmem [shape: f32[24,128], index: 2, kind: input, shape index: {}]
  %s3 = inlined_call_operand.vmem [shape: f32[384,128], index: 3, kind: input, shape index: {}]
  %s4 = inlined_call_operand.vmem [shape: f32[24,1], index: 4, kind: input, shape index: {}]
  %s5 = inlined_call_operand.hbm [shape: f32[128,128], index: 5, kind: input, shape index: {}]
  %s6 = inlined_call_operand.hbm [shape: f32[128,128], index: 6, kind: input, shape index: {}]
  %s7 = inlined_call_operand.vmem [shape: f32[1,128], index: 7, kind: input, shape index: {}]
  %s8 = inlined_call_operand.hbm [shape: f32[128,128], index: 8, kind: input, shape index: {}]
  %s9 = inlined_call_operand.hbm [shape: f32[128,128], index: 9, kind: input, shape index: {}]
  %s10 = inlined_call_operand.vmem [shape: f32[1,128], index: 10, kind: input, shape index: {}]
  %s11 = inlined_call_operand.hbm [shape: f32[24,128], index: 11, kind: output, shape index: {}]
  %s12 = sld [smem:[#allocation0]]
  $region101: #{tpu_custom_call.1} parent=0
    _
  %s14 = ssub.s32 1, %s12
  %s15 = scalar_select 0, %s14, %s12
  $region1: #{tpu_custom_call.1} parent=0
    #allocation4 [shape = 'u8[65536]{0}', space=vmem, size = 0x10000, scoped, tag = 'input window, operand 5, single buffered']
    #allocation5 [shape = 's32[2]{0}', space=sflag, size = 0x8, scoped, tag = 'scoped memory for tpu_custom_call.1']
    #allocation6 [shape = 's32[2]{0}', space=sflag, size = 0x8, scoped, tag = 'scoped memory for tpu_custom_call.1']
    #allocation7 [shape = 'u8[65536]{0}', space=vmem, size = 0x10000, scoped, tag = 'input window, operand 6, single buffered']
    #allocation8 [shape = 's32[1]{0}', space=sflag, size = 0x4, scoped, tag = 'scoped memory for tpu_custom_call.1']
    #allocation9 [shape = 'u8[65536]{0}', space=vmem, size = 0x10000, scoped, tag = 'input window, operand 8, single buffered']
    #allocation10 [shape = 'u8[65536]{0}', space=vmem, size = 0x10000, scoped, tag = 'input window, operand 9, single buffered']
    #allocation11 [shape = 's32[1]{0}', space=sflag, size = 0x4, scoped, tag = 'scoped memory for tpu_custom_call.1']
    #allocation12 [shape = 'u8[12288]{0}', space=vmem, size = 0x3000, scoped, tag = 'output window, operand 0, single buffered']
    %16 = vsyncpa [#allocation5], 0
    %17 = vsyncpa [#allocation8], 0
    %18 = vsyncpa [#allocation11], 0
    %19 = vsyncpa [#allocation6], 0
    loop: start=0, step=1, limit=5
    $region2: #{tpu_custom_call.1} parent=1 // loop_pre_header
      _
    $region3: #{tpu_custom_call.1} parent=1 // loop_header
      %s21 = sphi 0, %s25
      %p22 = scmp.ge.s32.totalorder %s21, 5
      %s31 = sphi 0, %s33
      %s34 = sphi 0, %s31
      %s35 = sphi 0, %s34
      %s51 = sphi 0, %s35
      %s57 = sphi 0, %s59
      %s60 = sphi 0, %s57
      %s61 = sphi 0, %s60
      %s77 = sphi 0, %s61
      %s81 = sphi 0, %s81
      %s83 = sphi 0, %s81
      %s84 = sphi 0, %s83
      %s98 = sphi 0, %s84
      %s104 = sphi 0, %s106
      %s107 = sphi 0, %s104
      %s108 = sphi 0, %s107
      %s124 = sphi 0, %s108
      %s128 = sphi 0, %s128
      %s130 = sphi 0, %s128
      %s131 = sphi 0, %s130
      %s145 = sphi 0, %s131
      %s149 = sphi 0, %s149
      %s151 = sphi 0, %s149
      %s152 = sphi 0, %s151
      %s166 = sphi 0, %s152
      %s170 = sphi 0, %s170
      %s172 = sphi 0, %s170
      %s173 = sphi 0, %s172
      %s187 = sphi 0, %s173
      %s191 = sphi 0, %s191
      %s193 = sphi 0, %s191
      %s194 = sphi 0, %s193
      %s208 = sphi 0, %s194
      %s212 = sphi 0, %s212
      %s214 = sphi 0, %s212
      %s215 = sphi 0, %s214
      %s229 = sphi 0, %s215
      %s233 = sphi 0, %s233
      %s235 = sphi 0, %s233
      %s236 = sphi 0, %s235
      %s250 = sphi 0, %s236
      %s254 = sphi 0, %s254
      %s256 = sphi 0, %s254
      %s257 = sphi 0, %s256
      %s271 = sphi 0, %s257
      %s275 = sphi 0, %s275
      %s277 = sphi 0, %s275
      %s278 = sphi 0, %s277
      %s292 = sphi 0, %s278
    $region4: #{tpu_custom_call.1} parent=1 // loop_header_branch
      %24 = sbr.rel (%p22) target = $region8
    $region5: #{tpu_custom_call.1} parent=1 // loop_body
      %s26 = ssub.s32 %s21, 1
      %s27 = ssub.s32 %s21, 2
      %s28 = sadd.s32 %s21, 1
      %s29 = ssub.s32 %s21, %s28
      %p30 = scmp.eq.s32.totalorder %s29, 0
      %s32 = sadd.s32 %s31, 1
      %s33 = scalar_select %p30, %s31, %s32
      %p36 = pneg %p30
      %p37 = scmp.eq.s32.totalorder %s21, 2
      %p38 = por %p36, %p37
      %p39 = scmp.ne.s32.totalorder %s31, %s34
      %p40 = scmp.eq.s32.totalorder %s21, 0
      %p41 = por %p39, %p40
      %p42 = scmp.ne.s32.totalorder %s31, %s34
      %p43 = scmp.eq.s32.totalorder %s26, 2
      %p44 = por %p42, %p43
      %p45 = scmp.ne.s32.totalorder %s34, %s35
      %p46 = scmp.eq.s32.totalorder %s26, 0
      %p47 = por %p45, %p46
      %p48 = scmp.ne.s32.totalorder %s34, %s35
      %p49 = scmp.eq.s32.totalorder %s27, 2
      %p50 = por %p48, %p49
      %p52 = scmp.ne.s32.totalorder %s35, %s51
      %p53 = scmp.eq.s32.totalorder %s27, 0
      %p54 = por %p52, %p53
      %s55 = ssub.s32 %s21, %s28
      %p56 = scmp.eq.s32.totalorder %s55, 0
      %s58 = sadd.s32 %s57, 1
      %s59 = scalar_select %p56, %s57, %s58
      %p62 = pneg %p56
      %p63 = scmp.eq.s32.totalorder %s21, 2
      %p64 = por %p62, %p63
      %p65 = scmp.ne.s32.totalorder %s57, %s60
      %p66 = scmp.eq.s32.totalorder %s21, 0
      %p67 = por %p65, %p66
      %p68 = scmp.ne.s32.totalorder %s57, %s60
      %p69 = scmp.eq.s32.totalorder %s26, 2
      %p70 = por %p68, %p69
      %p71 = scmp.ne.s32.totalorder %s60, %s61
      %p72 = scmp.eq.s32.totalorder %s26, 0
      %p73 = por %p71, %p72
      %p74 = scmp.ne.s32.totalorder %s60, %s61
      %p75 = scmp.eq.s32.totalorder %s27, 2
      %p76 = por %p74, %p75
      %p78 = scmp.ne.s32.totalorder %s61, %s77
      %p79 = scmp.eq.s32.totalorder %s27, 0
      %p80 = por %p78, %p79
      %s82 = sadd.s32 %s81, 1
      %p85 = scmp.eq.s32.totalorder %s21, 2
      %p86 = scmp.ne.s32.totalorder %s81, %s83
      %p87 = scmp.eq.s32.totalorder %s21, 0
      %p88 = por %p86, %p87
      %p89 = scmp.ne.s32.totalorder %s81, %s83
      %p90 = scmp.eq.s32.totalorder %s26, 2
      %p91 = por %p89, %p90
      %p92 = scmp.ne.s32.totalorder %s83, %s84
      %p93 = scmp.eq.s32.totalorder %s26, 0
      %p94 = por %p92, %p93
      %p95 = scmp.ne.s32.totalorder %s83, %s84
      %p96 = scmp.eq.s32.totalorder %s27, 2
      %p97 = por %p95, %p96
      %p99 = scmp.ne.s32.totalorder %s84, %s98
      %p100 = scmp.eq.s32.totalorder %s27, 0
      %p101 = por %p99, %p100
      %s102 = ssub.s32 %s21, %s28
      %p103 = scmp.eq.s32.totalorder %s102, 0
      %s105 = sadd.s32 %s104, 1
      %s106 = scalar_select %p103, %s104, %s105
      %p109 = pneg %p103
      %p110 = scmp.eq.s32.totalorder %s21, 2
      %p111 = por %p109, %p110
      %p112 = scmp.ne.s32.totalorder %s104, %s107
      %p113 = scmp.eq.s32.totalorder %s21, 0
      %p114 = por %p112, %p113
      %p115 = scmp.ne.s32.totalorder %s104, %s107
      %p116 = scmp.eq.s32.totalorder %s26, 2
      %p117 = por %p115, %p116
      %p118 = scmp.ne.s32.totalorder %s107, %s108
      %p119 = scmp.eq.s32.totalorder %s26, 0
      %p120 = por %p118, %p119
      %p121 = scmp.ne.s32.totalorder %s107, %s108
      %p122 = scmp.eq.s32.totalorder %s27, 2
      %p123 = por %p121, %p122
      %p125 = scmp.ne.s32.totalorder %s108, %s124
      %p126 = scmp.eq.s32.totalorder %s27, 0
      %p127 = por %p125, %p126
      %s129 = sadd.s32 %s128, 1
      %p132 = scmp.eq.s32.totalorder %s21, 2
      %p133 = scmp.ne.s32.totalorder %s128, %s130
      %p134 = scmp.eq.s32.totalorder %s21, 0
      %p135 = por %p133, %p134
      %p136 = scmp.ne.s32.totalorder %s128, %s130
      %p137 = scmp.eq.s32.totalorder %s26, 2
      %p138 = por %p136, %p137
      %p139 = scmp.ne.s32.totalorder %s130, %s131
      %p140 = scmp.eq.s32.totalorder %s26, 0
      %p141 = por %p139, %p140
      %p142 = scmp.ne.s32.totalorder %s130, %s131
      %p143 = scmp.eq.s32.totalorder %s27, 2
      %p144 = por %p142, %p143
      %p146 = scmp.ne.s32.totalorder %s131, %s145
      %p147 = scmp.eq.s32.totalorder %s27, 0
      %p148 = por %p146, %p147
      %s150 = sadd.s32 %s149, 1
      %p153 = scmp.eq.s32.totalorder %s21, 2
      %p154 = scmp.ne.s32.totalorder %s149, %s151
      %p155 = scmp.eq.s32.totalorder %s21, 0
      %p156 = por %p154, %p155
      %p157 = scmp.ne.s32.totalorder %s149, %s151
      %p158 = scmp.eq.s32.totalorder %s26, 2
      %p159 = por %p157, %p158
      %p160 = scmp.ne.s32.totalorder %s151, %s152
      %p161 = scmp.eq.s32.totalorder %s26, 0
      %p162 = por %p160, %p161
      %p163 = scmp.ne.s32.totalorder %s151, %s152
      %p164 = scmp.eq.s32.totalorder %s27, 2
      %p165 = por %p163, %p164
      %p167 = scmp.ne.s32.totalorder %s152, %s166
      %p168 = scmp.eq.s32.totalorder %s27, 0
      %p169 = por %p167, %p168
      %s171 = sadd.s32 %s170, 1
      %p174 = scmp.eq.s32.totalorder %s21, 2
      %p175 = scmp.ne.s32.totalorder %s170, %s172
      %p176 = scmp.eq.s32.totalorder %s21, 0
      %p177 = por %p175, %p176
      %p178 = scmp.ne.s32.totalorder %s170, %s172
      %p179 = scmp.eq.s32.totalorder %s26, 2
      %p180 = por %p178, %p179
      %p181 = scmp.ne.s32.totalorder %s172, %s173
      %p182 = scmp.eq.s32.totalorder %s26, 0
      %p183 = por %p181, %p182
      %p184 = scmp.ne.s32.totalorder %s172, %s173
      %p185 = scmp.eq.s32.totalorder %s27, 2
      %p186 = por %p184, %p185
      %p188 = scmp.ne.s32.totalorder %s173, %s187
      %p189 = scmp.eq.s32.totalorder %s27, 0
      %p190 = por %p188, %p189
      %s192 = sadd.s32 %s191, 1
      %p195 = scmp.eq.s32.totalorder %s21, 2
      %p196 = scmp.ne.s32.totalorder %s191, %s193
      %p197 = scmp.eq.s32.totalorder %s21, 0
      %p198 = por %p196, %p197
      %p199 = scmp.ne.s32.totalorder %s191, %s193
      %p200 = scmp.eq.s32.totalorder %s26, 2
      %p201 = por %p199, %p200
      %p202 = scmp.ne.s32.totalorder %s193, %s194
      %p203 = scmp.eq.s32.totalorder %s26, 0
      %p204 = por %p202, %p203
      %p205 = scmp.ne.s32.totalorder %s193, %s194
      %p206 = scmp.eq.s32.totalorder %s27, 2
      %p207 = por %p205, %p206
      %p209 = scmp.ne.s32.totalorder %s194, %s208
      %p210 = scmp.eq.s32.totalorder %s27, 0
      %p211 = por %p209, %p210
      %s213 = sadd.s32 %s212, 1
      %p216 = scmp.eq.s32.totalorder %s21, 2
      %p217 = scmp.ne.s32.totalorder %s212, %s214
      %p218 = scmp.eq.s32.totalorder %s21, 0
      %p219 = por %p217, %p218
      %p220 = scmp.ne.s32.totalorder %s212, %s214
      %p221 = scmp.eq.s32.totalorder %s26, 2
      %p222 = por %p220, %p221
      %p223 = scmp.ne.s32.totalorder %s214, %s215
      %p224 = scmp.eq.s32.totalorder %s26, 0
      %p225 = por %p223, %p224
      %p226 = scmp.ne.s32.totalorder %s214, %s215
      %p227 = scmp.eq.s32.totalorder %s27, 2
      %p228 = por %p226, %p227
      %p230 = scmp.ne.s32.totalorder %s215, %s229
      %p231 = scmp.eq.s32.totalorder %s27, 0
      %p232 = por %p230, %p231
      %s234 = sadd.s32 %s233, 1
      %p237 = scmp.eq.s32.totalorder %s21, 2
      %p238 = scmp.ne.s32.totalorder %s233, %s235
      %p239 = scmp.eq.s32.totalorder %s21, 0
      %p240 = por %p238, %p239
      %p241 = scmp.ne.s32.totalorder %s233, %s235
      %p242 = scmp.eq.s32.totalorder %s26, 2
      %p243 = por %p241, %p242
      %p244 = scmp.ne.s32.totalorder %s235, %s236
      %p245 = scmp.eq.s32.totalorder %s26, 0
      %p246 = por %p244, %p245
      %p247 = scmp.ne.s32.totalorder %s235, %s236
      %p248 = scmp.eq.s32.totalorder %s27, 2
      %p249 = por %p247, %p248
      %p251 = scmp.ne.s32.totalorder %s236, %s250
      %p252 = scmp.eq.s32.totalorder %s27, 0
      %p253 = por %p251, %p252
      %s255 = sadd.s32 %s254, 1
      %p258 = scmp.eq.s32.totalorder %s21, 2
      %p259 = scmp.ne.s32.totalorder %s254, %s256
      %p260 = scmp.eq.s32.totalorder %s21, 0
      %p261 = por %p259, %p260
      %p262 = scmp.ne.s32.totalorder %s254, %s256
      %p263 = scmp.eq.s32.totalorder %s26, 2
      %p264 = por %p262, %p263
      %p265 = scmp.ne.s32.totalorder %s256, %s257
      %p266 = scmp.eq.s32.totalorder %s26, 0
      %p267 = por %p265, %p266
      %p268 = scmp.ne.s32.totalorder %s256, %s257
      %p269 = scmp.eq.s32.totalorder %s27, 2
      %p270 = por %p268, %p269
      %p272 = scmp.ne.s32.totalorder %s257, %s271
      %p273 = scmp.eq.s32.totalorder %s27, 0
      %p274 = por %p272, %p273
      %s276 = sadd.s32 %s275, 1
      %p279 = scmp.eq.s32.totalorder %s21, 2
      %p280 = scmp.ne.s32.totalorder %s275, %s277
      %p281 = scmp.eq.s32.totalorder %s21, 0
      %p282 = por %p280, %p281
      %p283 = scmp.ne.s32.totalorder %s275, %s277
      %p284 = scmp.eq.s32.totalorder %s26, 2
      %p285 = por %p283, %p284
      %p286 = scmp.ne.s32.totalorder %s277, %s278
      %p287 = scmp.eq.s32.totalorder %s26, 0
      %p288 = por %p286, %p287
      %p289 = scmp.ne.s32.totalorder %s277, %s278
      %p290 = scmp.eq.s32.totalorder %s27, 2
      %p291 = por %p289, %p290
      %p293 = scmp.ne.s32.totalorder %s278, %s292
      %p294 = scmp.eq.s32.totalorder %s27, 0
      %p295 = por %p293, %p294
      %p296 = scmp.le.s32.totalorder 1, %s21
      %p297 = scmp.lt.s32.totalorder %s21, 4
      %p298 = pnand %p296, %p297
      %p299 = pneg %p298
      // Predicated region
      $region9: #{tpu_custom_call.1} parent=5 // pred_check
        _
      $region10: #{tpu_custom_call.1} parent=5 // pred_check_branch
        %301 = sbr.rel (%p298) target = $region12
      $region11: #{tpu_custom_call.1} parent=5 // pred_region
        %s302 = ssub.s32 %s21, 1
        // Predicated region
        $region13: #{tpu_custom_call.1} parent=11 // pred_check
          %p303 = pneg %p94
        $region14: #{tpu_custom_call.1} parent=11 // pred_check_branch
          %305 = sbr.rel (%p303) target = $region16
        $region15: #{tpu_custom_call.1} parent=11 // pred_region
          _
        $region16: #{tpu_custom_call.1} parent=11 // pred_fallthru
          _
        // Predicated region
        $region17: #{tpu_custom_call.1} parent=11 // pred_check
          %p306 = pneg %p141
        $region18: #{tpu_custom_call.1} parent=11 // pred_check_branch
          %308 = sbr.rel (%p306) target = $region20
        $region19: #{tpu_custom_call.1} parent=11 // pred_region
          _
        $region20: #{tpu_custom_call.1} parent=11 // pred_fallthru
          _
        // Predicated region
        $region21: #{tpu_custom_call.1} parent=11 // pred_check
          %p309 = pneg %p162
        $region22: #{tpu_custom_call.1} parent=11 // pred_check_branch
          %311 = sbr.rel (%p309) target = $region24
        $region23: #{tpu_custom_call.1} parent=11 // pred_region
          %s313 = ssub.s32 2048, 2048
          %314 = vsyncadd [#allocation5], %s313
          %s315 = sshll.u32 [#allocation4], 4
          %s316 = int_to_ptr.vmem [resolvable:$true] %s315
          %321 = dma.hbm_to_vmem [thread:$0]  %s5, 2048, %s316, [#allocation5], 128, 128, 8
        $region24: #{tpu_custom_call.1} parent=11 // pred_fallthru
          _
        // Predicated region
        $region25: #{tpu_custom_call.1} parent=11 // pred_check
          %p322 = pneg %p183
        $region26: #{tpu_custom_call.1} parent=11 // pred_check_branch
          %324 = sbr.rel (%p322) target = $region28
        $region27: #{tpu_custom_call.1} parent=11 // pred_region
          %s326 = ssub.s32 2048, 2048
          %327 = vsyncadd [#allocation8], %s326
          %s328 = sshll.u32 [#allocation7], 4
          %s329 = int_to_ptr.vmem [resolvable:$true] %s328
          %334 = dma.hbm_to_vmem [thread:$0]  %s6, 2048, %s329, [#allocation8], 128, 128, 8
        $region28: #{tpu_custom_call.1} parent=11 // pred_fallthru
          _
        // Predicated region
        $region29: #{tpu_custom_call.1} parent=11 // pred_check
          %p335 = pneg %p204
        $region30: #{tpu_custom_call.1} parent=11 // pred_check_branch
          %337 = sbr.rel (%p335) target = $region32
        $region31: #{tpu_custom_call.1} parent=11 // pred_region
          _
        $region32: #{tpu_custom_call.1} parent=11 // pred_fallthru
          _
        // Predicated region
        $region33: #{tpu_custom_call.1} parent=11 // pred_check
          %p338 = pneg %p225
        $region34: #{tpu_custom_call.1} parent=11 // pred_check_branch
          %340 = sbr.rel (%p338) target = $region36
        $region35: #{tpu_custom_call.1} parent=11 // pred_region
          %s342 = ssub.s32 2048, 2048
          %343 = vsyncadd [#allocation8], %s342
          %s344 = sshll.u32 [#allocation9], 4
          %s345 = int_to_ptr.vmem [resolvable:$true] %s344
          %350 = dma.hbm_to_vmem [thread:$0]  %s8, 2048, %s345, [#allocation8], 128, 128, 8
        $region36: #{tpu_custom_call.1} parent=11 // pred_fallthru
          _
        // Predicated region
        $region37: #{tpu_custom_call.1} parent=11 // pred_check
          %p351 = pneg %p246
        $region38: #{tpu_custom_call.1} parent=11 // pred_check_branch
          %353 = sbr.rel (%p351) target = $region40
        $region39: #{tpu_custom_call.1} parent=11 // pred_region
          %s355 = ssub.s32 2048, 2048
          %356 = vsyncadd [#allocation11], %s355
          %s357 = sshll.u32 [#allocation10], 4
          %s358 = int_to_ptr.vmem [resolvable:$true] %s357
          %363 = dma.hbm_to_vmem [thread:$0]  %s9, 2048, %s358, [#allocation11], 128, 128, 8
        $region40: #{tpu_custom_call.1} parent=11 // pred_fallthru
          _
        // Predicated region
        $region41: #{tpu_custom_call.1} parent=11 // pred_check
          %p364 = pneg %p267
        $region42: #{tpu_custom_call.1} parent=11 // pred_check_branch
          %366 = sbr.rel (%p364) target = $region44
        $region43: #{tpu_custom_call.1} parent=11 // pred_region
          _
        $region44: #{tpu_custom_call.1} parent=11 // pred_fallthru
          _
      $region12: #{tpu_custom_call.1} parent=5 // pred_fallthru
        _
      %p367 = scmp.lt.s32.totalorder %s21, 3
      // Predicated region
      $region45: #{tpu_custom_call.1} parent=5 // pred_check
        %p368 = pneg %p367
      $region46: #{tpu_custom_call.1} parent=5 // pred_check_branch
        %370 = sbr.rel (%p368) target = $region48
      $region47: #{tpu_custom_call.1} parent=5 // pred_region
        // Predicated region
        $region49: #{tpu_custom_call.1} parent=47 // pred_check
          %p371 = pneg %p41
        $region50: #{tpu_custom_call.1} parent=47 // pred_check_branch
          %373 = sbr.rel (%p371) target = $region52
        $region51: #{tpu_custom_call.1} parent=47 // pred_region
          %s374 = smul.u32 16, %s21
          %p375 = scmp.lt.s32.totalorder %s374, 47
          %s376 = scalar_select %p375, %s374, 47
          %s377 = smul.addr %s376, 8
          %s378 = scalar_lea.vmem %s0, %s377
          %s379 = smul.u32 16, %s21
        $region52: #{tpu_custom_call.1} parent=47 // pred_fallthru
          _
        // Predicated region
        $region53: #{tpu_custom_call.1} parent=47 // pred_check
          %p380 = pneg %p67
        $region54: #{tpu_custom_call.1} parent=47 // pred_check_branch
          %382 = sbr.rel (%p380) target = $region56
        $region55: #{tpu_custom_call.1} parent=47 // pred_region
          %p383 = scmp.lt.s32.totalorder %s21, 2
          %s384 = scalar_select %p383, %s21, 2
          %s385 = scalar_lea.vmem %s1, %s384
        $region56: #{tpu_custom_call.1} parent=47 // pred_fallthru
          _
        // Predicated region
        $region57: #{tpu_custom_call.1} parent=47 // pred_check
          %p386 = pneg %p114
        $region58: #{tpu_custom_call.1} parent=47 // pred_check_branch
          %388 = sbr.rel (%p386) target = $region60
        $region59: #{tpu_custom_call.1} parent=47 // pred_region
          %s389 = smul.u32 16, %s21
          %p390 = scmp.lt.s32.totalorder %s389, 47
          %s391 = scalar_select %p390, %s389, 47
          %s392 = smul.addr %s391, 8
          %s393 = scalar_lea.vmem %s3, %s392
          %s394 = smul.u32 16, %s21
        $region60: #{tpu_custom_call.1} parent=47 // pred_fallthru
          _
      $region48: #{tpu_custom_call.1} parent=5 // pred_fallthru
        _
      %p395 = scmp.le.s32.totalorder 1, %s21
      %p396 = scmp.lt.s32.totalorder %s21, 4
      %p397 = pnand %p395, %p396
      %p398 = pneg %p397
      // Predicated region
      $region61: #{tpu_custom_call.1} parent=5 // pred_check
        _
      $region62: #{tpu_custom_call.1} parent=5 // pred_check_branch
        %400 = sbr.rel (%p397) target = $region64
      $region63: #{tpu_custom_call.1} parent=5 // pred_region
        %s401 = ssub.s32 %s21, 1
        // Predicated region
        $region65: #{tpu_custom_call.1} parent=63 // pred_check
          %p402 = pneg %p162
        $region66: #{tpu_custom_call.1} parent=63 // pred_check_branch
          %404 = sbr.rel (%p402) target = $region68
        $region67: #{tpu_custom_call.1} parent=63 // pred_region
          %405 = dma.done [#allocation5], 2048
        $region68: #{tpu_custom_call.1} parent=63 // pred_fallthru
          _
        // Predicated region
        $region69: #{tpu_custom_call.1} parent=63 // pred_check
          %p406 = pneg %p183
        $region70: #{tpu_custom_call.1} parent=63 // pred_check_branch
          %408 = sbr.rel (%p406) target = $region72
        $region71: #{tpu_custom_call.1} parent=63 // pred_region
          %409 = dma.done [#allocation8], 2048
        $region72: #{tpu_custom_call.1} parent=63 // pred_fallthru
          _
        // Predicated region
        $region73: #{tpu_custom_call.1} parent=63 // pred_check
          %p410 = pneg %p225
        $region74: #{tpu_custom_call.1} parent=63 // pred_check_branch
          %412 = sbr.rel (%p410) target = $region76
        $region75: #{tpu_custom_call.1} parent=63 // pred_region
          %413 = dma.done [#allocation8], 2048
        $region76: #{tpu_custom_call.1} parent=63 // pred_fallthru
          _
        // Predicated region
        $region77: #{tpu_custom_call.1} parent=63 // pred_check
          %p414 = pneg %p246
        $region78: #{tpu_custom_call.1} parent=63 // pred_check_branch
          %416 = sbr.rel (%p414) target = $region80
        $region79: #{tpu_custom_call.1} parent=63 // pred_region
          %417 = dma.done [#allocation11], 2048
        $region80: #{tpu_custom_call.1} parent=63 // pred_fallthru
          _
        %s418 = smul.u32 16, %s26
        %p419 = scmp.lt.s32.totalorder %s418, 47
        %s420 = scalar_select %p419, %s418, 47
        %s421 = smul.addr %s420, 8
        %s422 = scalar_lea.vmem %s0, %s421
        %p423 = pneg %p47
        %p424 = pneg %p44
        %p425 = scmp.lt.s32.totalorder %s26, 2
        %s426 = scalar_select %p425, %s26, 2
        %s427 = scalar_lea.vmem %s1, %s426
        %p428 = pneg %p73
        %p429 = pneg %p70
        %p430 = pneg %p94
        %p431 = pneg %p91
        %s432 = smul.u32 16, %s26
        %p433 = scmp.lt.s32.totalorder %s432, 47
        %s434 = scalar_select %p433, %s432, 47
        %s435 = smul.addr %s434, 8
        %s436 = scalar_lea.vmem %s3, %s435
        %p437 = pneg %p120
        %p438 = pneg %p117
        %p439 = pneg %p141
        %p440 = pneg %p138
        %p441 = pneg %p162
        %p442 = pneg %p159
        %p443 = pneg %p183
        %p444 = pneg %p180
        %p445 = pneg %p204
        %p446 = pneg %p201
        %p447 = pneg %p225
        %p448 = pneg %p222
        %p449 = pneg %p246
        %p450 = pneg %p243
        %p451 = pneg %p267
        %p452 = pneg %p264
        %p453 = pneg %p288
        %p454 = pneg %p285
        %s455 = smul.u32 16, %s26
        %p456 = scmp.lt.s32.totalorder %s455, 47
        %s457 = scalar_select %p456, %s455, 47
        %s458 = smul.addr %s457, 8
        %s459 = scalar_lea.vmem %s0, %s458
        %s460 = smul.u32 16, %s26
        %p461 = scmp.lt.s32.totalorder %s26, 2
        %s462 = scalar_select %p461, %s26, 2
        %s463 = scalar_lea.vmem %s1, %s462
        %s464 = smul.u32 16, %s26
        %p465 = scmp.lt.s32.totalorder %s464, 47
        %s466 = scalar_select %p465, %s464, 47
        %s467 = smul.addr %s466, 8
        %s468 = scalar_lea.vmem %s3, %s467
        %s469 = smul.u32 16, %s26
        %p470 = scmp.eq.s32.totalorder %s26, 0
        // Predicated region
        $region81: #{tpu_custom_call.1} parent=63 // pred_check
          %p471 = pneg %p470
        $region82: #{tpu_custom_call.1} parent=63 // pred_check_branch
          %473 = sbr.rel (%p471) target = $region84
        $region83: #{tpu_custom_call.1} parent=63 // pred_region
          %474 = vst [vmem:[#allocation2] sm:$0xff] 0.0
          %475 = vst [vmem:[#allocation2 + $0x8] sm:$0xff] 0.0
          %476 = vst [vmem:[#allocation2 + $0x10] sm:$0xff] 0.0
          %v477 = vld [vmem:[%s2] sm:$0xff]
          %v478 = vld [vmem:[%s2 + $0x8] sm:$0xff]
          %v479 = vld [vmem:[%s2 + $0x10] sm:$0xff]
          %v480 = vld [vmem:[#allocation4] sm:$0xff]
          %v481 = vld [vmem:[#allocation4 + $0x8] sm:$0xff]
          %v482 = vld [vmem:[#allocation4 + $0x10] sm:$0xff]
          %v483 = vld [vmem:[#allocation4 + $0x18] sm:$0xff]
          %v484 = vld [vmem:[#allocation4 + $0x20] sm:$0xff]
          %v485 = vld [vmem:[#allocation4 + $0x28] sm:$0xff]
          %v486 = vld [vmem:[#allocation4 + $0x30] sm:$0xff]
          %v487 = vld [vmem:[#allocation4 + $0x38] sm:$0xff]
          %v488 = vld [vmem:[#allocation4 + $0x40] sm:$0xff]
          %v489 = vld [vmem:[#allocation4 + $0x48] sm:$0xff]
          %v490 = vld [vmem:[#allocation4 + $0x50] sm:$0xff]
          %v491 = vld [vmem:[#allocation4 + $0x58] sm:$0xff]
          %v492 = vld [vmem:[#allocation4 + $0x60] sm:$0xff]
          %v493 = vld [vmem:[#allocation4 + $0x68] sm:$0xff]
          %v494 = vld [vmem:[#allocation4 + $0x70] sm:$0xff]
          %v495 = vld [vmem:[#allocation4 + $0x78] sm:$0xff]
          %496 = vmatprep.subr.mxu0 0.0
          %497 = vmatpush1.msra.mxu0 %v495
          %498 = vmatprep.subr.mxu0 0.0
          %499 = vmatpush1.msra.mxu0 %v494
          %500 = vmatprep.subr.mxu0 0.0
          %501 = vmatpush1.msra.mxu0 %v493
          %502 = vmatprep.subr.mxu0 0.0
          %503 = vmatpush1.msra.mxu0 %v492
          %504 = vmatprep.subr.mxu0 0.0
          %505 = vmatpush1.msra.mxu0 %v491
          %506 = vmatprep.subr.mxu0 0.0
          %507 = vmatpush1.msra.mxu0 %v490
          %508 = vmatprep.subr.mxu0 0.0
          %509 = vmatpush1.msra.mxu0 %v489
          %510 = vmatprep.subr.mxu0 0.0
          %511 = vmatpush1.msra.mxu0 %v488
          %512 = vmatprep.subr.mxu0 0.0
          %513 = vmatpush1.msra.mxu0 %v487
          %514 = vmatprep.subr.mxu0 0.0
          %515 = vmatpush1.msra.mxu0 %v486
          %516 = vmatprep.subr.mxu0 0.0
          %517 = vmatpush1.msra.mxu0 %v485
          %518 = vmatprep.subr.mxu0 0.0
          %519 = vmatpush1.msra.mxu0 %v484
          %520 = vmatprep.subr.mxu0 0.0
          %521 = vmatpush1.msra.mxu0 %v483
          %522 = vmatprep.subr.mxu0 0.0
          %523 = vmatpush1.msra.mxu0 %v482
          %524 = vmatprep.subr.mxu0 0.0
          %525 = vmatpush1.msra.mxu0 %v481
          %526 = vmatprep.subr.mxu0 0.0
          %527 = vmatpush1.msra.mxu0 %v480
          %528 = vmatprep.subr.mxu0 0.0
          %529 = vmatpush2.msra.mxu0 0.0
          %530 = vmatprep.subr.mxu0 0.0
          %531 = vmatpush2.msra.mxu0 0.0
          %532 = vmatprep.subr.mxu0 0.0
          %533 = vmatpush2.msra.mxu0 0.0
          %534 = vmatprep.subr.mxu0 0.0
          %535 = vmatpush2.msra.mxu0 0.0
          %536 = vmatprep.subr.mxu0 0.0
          %537 = vmatpush2.msra.mxu0 0.0
          %538 = vmatprep.subr.mxu0 0.0
          %539 = vmatpush2.msra.mxu0 0.0
          %540 = vmatprep.subr.mxu0 0.0
          %541 = vmatpush2.msra.mxu0 0.0
          %542 = vmatprep.subr.mxu0 0.0
          %543 = vmatpush2.msra.mxu0 0.0
          %544 = vmatprep.subr.mxu0 0.0
          %545 = vmatpush2.msra.mxu0 0.0
          %546 = vmatprep.subr.mxu0 0.0
          %547 = vmatpush2.msra.mxu0 0.0
          %548 = vmatprep.subr.mxu0 0.0
          %549 = vmatpush2.msra.mxu0 0.0
          %550 = vmatprep.subr.mxu0 0.0
          %551 = vmatpush2.msra.mxu0 0.0
          %552 = vmatprep.subr.mxu0 0.0
          %553 = vmatpush2.msra.mxu0 0.0
          %554 = vmatprep.subr.mxu0 0.0
          %555 = vmatpush2.msra.mxu0 0.0
          %556 = vmatprep.subr.mxu0 0.0
          %557 = vmatpush2.msra.mxu0 0.0
          %558 = vmatprep.subr.mxu0 0.0
          %559 = vmatpush2.msra.mxu0 0.0
          %560 = vmatprep.mubr.f32.mxu0 0.0
          %561 = vmatmul.mubr.f32.gmra.mxu0 %v477
          %v562 = vpop.f32.mrf.mxu0
          %v563 = vadd.f32 0.0, %v562
          %v564 = vpop.f32.mrf.mxu0
          %565 = vmatprep.mubr.f32.mxu0 0.0
          %566 = vmatmul.mubr.f32.gmra.mxu0 %v478
          %v567 = vpop.f32.mrf.mxu0
          %v568 = vadd.f32 0.0, %v567
          %v569 = vpop.f32.mrf.mxu0
          %570 = vmatprep.mubr.f32.mxu0 0.0
          %571 = vmatmul.mubr.f32.gmra.mxu0 %v479
          %v572 = vpop.f32.mrf.mxu0
          %v573 = vadd.f32 0.0, %v572
          %v574 = vpop.f32.mrf.mxu0
          %575 = vdwg.mxu0
          %576 = vst [vmem:[#allocation3] sm:$0xff] %v563
          %577 = vst [vmem:[#allocation3 + $0x8] sm:$0xff] %v568
          %578 = vst [vmem:[#allocation3 + $0x10] sm:$0xff] %v573
        $region84: #{tpu_custom_call.1} parent=63 // pred_fallthru
          _
        %v579 = vld [vmem:[%s459] sm:$0xff]
        %v580 = vld [vmem:[%s459 + $0x8] sm:$0xff]
        %v581 = vld [vmem:[%s459 + $0x10] sm:$0xff]
        %v582 = vld [vmem:[%s459 + $0x18] sm:$0xff]
        %v583 = vld [vmem:[%s459 + $0x20] sm:$0xff]
        %v584 = vld [vmem:[%s459 + $0x28] sm:$0xff]
        %v585 = vld [vmem:[%s459 + $0x30] sm:$0xff]
        %v586 = vld [vmem:[%s459 + $0x38] sm:$0xff]
        %v587 = vld [vmem:[%s459 + $0x40] sm:$0xff]
        %v588 = vld [vmem:[%s459 + $0x48] sm:$0xff]
        %v589 = vld [vmem:[%s459 + $0x50] sm:$0xff]
        %v590 = vld [vmem:[%s459 + $0x58] sm:$0xff]
        %v591 = vld [vmem:[%s459 + $0x60] sm:$0xff]
        %v592 = vld [vmem:[%s459 + $0x68] sm:$0xff]
        %v593 = vld [vmem:[%s459 + $0x70] sm:$0xff]
        %v594 = vld [vmem:[%s459 + $0x78] sm:$0xff]
        %v595 = vlaneseq
        %v596 = vand.u32 %v595, 127
        %597 = vset.pattern.permute.xlu0 0
        %598 = vperm.xlu0 %597, %v579
        %v599 = vpop.permute.xlu0 %598
        %600 = vset.pattern.permute.xlu0 0
        %601 = vperm.xlu0 %600, %v580
        %v602 = vpop.permute.xlu0 %601
        %603 = vset.pattern.permute.xlu0 0
        %604 = vperm.xlu0 %603, %v581
        %v605 = vpop.permute.xlu0 %604
        %606 = vset.pattern.permute.xlu0 0
        %607 = vperm.xlu0 %606, %v582
        %v608 = vpop.permute.xlu0 %607
        %609 = vset.pattern.permute.xlu0 0
        %610 = vperm.xlu0 %609, %v583
        %v611 = vpop.permute.xlu0 %610
        %612 = vset.pattern.permute.xlu0 0
        %613 = vperm.xlu0 %612, %v584
        %v614 = vpop.permute.xlu0 %613
        %615 = vset.pattern.permute.xlu0 0
        %616 = vperm.xlu0 %615, %v585
        %v617 = vpop.permute.xlu0 %616
        %618 = vset.pattern.permute.xlu0 0
        %619 = vperm.xlu0 %618, %v586
        %v620 = vpop.permute.xlu0 %619
        %621 = vset.pattern.permute.xlu0 0
        %622 = vperm.xlu0 %621, %v587
        %v623 = vpop.permute.xlu0 %622
        %624 = vset.pattern.permute.xlu0 0
        %625 = vperm.xlu0 %624, %v588
        %v626 = vpop.permute.xlu0 %625
        %627 = vset.pattern.permute.xlu0 0
        %628 = vperm.xlu0 %627, %v589
        %v629 = vpop.permute.xlu0 %628
        %630 = vset.pattern.permute.xlu0 0
        %631 = vperm.xlu0 %630, %v590
        %v632 = vpop.permute.xlu0 %631
        %633 = vset.pattern.permute.xlu0 0
        %634 = vperm.xlu0 %633, %v591
        %v635 = vpop.permute.xlu0 %634
        %636 = vset.pattern.permute.xlu0 0
        %637 = vperm.xlu0 %636, %v592
        %v638 = vpop.permute.xlu0 %637
        %639 = vset.pattern.permute.xlu0 0
        %640 = vperm.xlu0 %639, %v593
        %v641 = vpop.permute.xlu0 %640
        %642 = vset.pattern.permute.xlu0 0
        %643 = vperm.xlu0 %642, %v594
        %v644 = vpop.permute.xlu0 %643
        %vm645 = vcmp.eq.s32.totalorder %v596, %v599
        %vm646 = vcmp.eq.s32.totalorder %v596, %v602
        %vm647 = vcmp.eq.s32.totalorder %v596, %v605
        %vm648 = vcmp.eq.s32.totalorder %v596, %v608
        %vm649 = vcmp.eq.s32.totalorder %v596, %v611
        %vm650 = vcmp.eq.s32.totalorder %v596, %v614
        %vm651 = vcmp.eq.s32.totalorder %v596, %v617
        %vm652 = vcmp.eq.s32.totalorder %v596, %v620
        %vm653 = vcmp.eq.s32.totalorder %v596, %v623
        %vm654 = vcmp.eq.s32.totalorder %v596, %v626
        %vm655 = vcmp.eq.s32.totalorder %v596, %v629
        %vm656 = vcmp.eq.s32.totalorder %v596, %v632
        %vm657 = vcmp.eq.s32.totalorder %v596, %v635
        %vm658 = vcmp.eq.s32.totalorder %v596, %v638
        %vm659 = vcmp.eq.s32.totalorder %v596, %v641
        %vm660 = vcmp.eq.s32.totalorder %v596, %v644
        %v661 = vsel %vm645, 1, 0
        %v662 = vsel %vm646, 1, 0
        %v663 = vsel %vm647, 1, 0
        %v664 = vsel %vm648, 1, 0
        %v665 = vsel %vm649, 1, 0
        %v666 = vsel %vm650, 1, 0
        %v667 = vsel %vm651, 1, 0
        %v668 = vsel %vm652, 1, 0
        %v669 = vsel %vm653, 1, 0
        %v670 = vsel %vm654, 1, 0
        %v671 = vsel %vm655, 1, 0
        %v672 = vsel %vm656, 1, 0
        %v673 = vsel %vm657, 1, 0
        %v674 = vsel %vm658, 1, 0
        %v675 = vsel %vm659, 1, 0
        %v676 = vsel %vm660, 1, 0
        %v677 = vcvt.s32.f32 %v661
        %v678 = vcvt.s32.f32 %v662
        %v679 = vcvt.s32.f32 %v663
        %v680 = vcvt.s32.f32 %v664
        %v681 = vcvt.s32.f32 %v665
        %v682 = vcvt.s32.f32 %v666
        %v683 = vcvt.s32.f32 %v667
        %v684 = vcvt.s32.f32 %v668
        %v685 = vcvt.s32.f32 %v669
        %v686 = vcvt.s32.f32 %v670
        %v687 = vcvt.s32.f32 %v671
        %v688 = vcvt.s32.f32 %v672
        %v689 = vcvt.s32.f32 %v673
        %v690 = vcvt.s32.f32 %v674
        %v691 = vcvt.s32.f32 %v675
        %v692 = vcvt.s32.f32 %v676
        %v693 = vld [vmem:[#allocation3] sm:$0xff]
        %v694 = vld [vmem:[#allocation3 + $0x8] sm:$0xff]
        %v695 = vld [vmem:[#allocation3 + $0x10] sm:$0xff]
        %v696 = vld [vmem:[%s468] sm:$0xff]
        %v697 = vld [vmem:[%s468 + $0x8] sm:$0xff]
        %v698 = vld [vmem:[%s468 + $0x10] sm:$0xff]
        %v699 = vld [vmem:[%s468 + $0x18] sm:$0xff]
        %v700 = vld [vmem:[%s468 + $0x20] sm:$0xff]
        %v701 = vld [vmem:[%s468 + $0x28] sm:$0xff]
        %v702 = vld [vmem:[%s468 + $0x30] sm:$0xff]
        %v703 = vld [vmem:[%s468 + $0x38] sm:$0xff]
        %v704 = vld [vmem:[%s468 + $0x40] sm:$0xff]
        %v705 = vld [vmem:[%s468 + $0x48] sm:$0xff]
        %v706 = vld [vmem:[%s468 + $0x50] sm:$0xff]
        %v707 = vld [vmem:[%s468 + $0x58] sm:$0xff]
        %v708 = vld [vmem:[%s468 + $0x60] sm:$0xff]
        %v709 = vld [vmem:[%s468 + $0x68] sm:$0xff]
        %v710 = vld [vmem:[%s468 + $0x70] sm:$0xff]
        %v711 = vld [vmem:[%s468 + $0x78] sm:$0xff]
        %v712 = vld [vmem:[#allocation7] sm:$0xff]
        %v713 = vld [vmem:[#allocation7 + $0x8] sm:$0xff]
        %v714 = vld [vmem:[#allocation7 + $0x10] sm:$0xff]
        %v715 = vld [vmem:[#allocation7 + $0x18] sm:$0xff]
        %v716 = vld [vmem:[#allocation7 + $0x20] sm:$0xff]
        %v717 = vld [vmem:[#allocation7 + $0x28] sm:$0xff]
        %v718 = vld [vmem:[#allocation7 + $0x30] sm:$0xff]
        %v719 = vld [vmem:[#allocation7 + $0x38] sm:$0xff]
        %v720 = vld [vmem:[#allocation7 + $0x40] sm:$0xff]
        %v721 = vld [vmem:[#allocation7 + $0x48] sm:$0xff]
        %v722 = vld [vmem:[#allocation7 + $0x50] sm:$0xff]
        %v723 = vld [vmem:[#allocation7 + $0x58] sm:$0xff]
        %v724 = vld [vmem:[#allocation7 + $0x60] sm:$0xff]
        %v725 = vld [vmem:[#allocation7 + $0x68] sm:$0xff]
        %v726 = vld [vmem:[#allocation7 + $0x70] sm:$0xff]
        %v727 = vld [vmem:[#allocation7 + $0x78] sm:$0xff]
        %728 = vmatprep.subr.mxu0 0.0
        %729 = vmatpush1.msra.mxu0 %v727
        %730 = vmatprep.subr.mxu0 0.0
        %731 = vmatpush1.msra.mxu0 %v726
        %732 = vmatprep.subr.mxu0 0.0
        %733 = vmatpush1.msra.mxu0 %v725
        %734 = vmatprep.subr.mxu0 0.0
        %735 = vmatpush1.msra.mxu0 %v724
        %736 = vmatprep.subr.mxu0 0.0
        %737 = vmatpush1.msra.mxu0 %v723
        %738 = vmatprep.subr.mxu0 0.0
        %739 = vmatpush1.msra.mxu0 %v722
        %740 = vmatprep.subr.mxu0 0.0
        %741 = vmatpush1.msra.mxu0 %v721
        %742 = vmatprep.subr.mxu0 0.0
        %743 = vmatpush1.msra.mxu0 %v720
        %744 = vmatprep.subr.mxu0 0.0
        %745 = vmatpush1.msra.mxu0 %v719
        %746 = vmatprep.subr.mxu0 0.0
        %747 = vmatpush1.msra.mxu0 %v718
        %748 = vmatprep.subr.mxu0 0.0
        %749 = vmatpush1.msra.mxu0 %v717
        %750 = vmatprep.subr.mxu0 0.0
        %751 = vmatpush1.msra.mxu0 %v716
        %752 = vmatprep.subr.mxu0 0.0
        %753 = vmatpush1.msra.mxu0 %v715
        %754 = vmatprep.subr.mxu0 0.0
        %755 = vmatpush1.msra.mxu0 %v714
        %756 = vmatprep.subr.mxu0 0.0
        %757 = vmatpush1.msra.mxu0 %v713
        %758 = vmatprep.subr.mxu0 0.0
        %759 = vmatpush1.msra.mxu0 %v712
        %760 = vmatprep.subr.mxu0 0.0
        %761 = vmatpush2.msra.mxu0 0.0
        %762 = vmatprep.subr.mxu0 0.0
        %763 = vmatpush2.msra.mxu0 0.0
        %764 = vmatprep.subr.mxu0 0.0
        %765 = vmatpush2.msra.mxu0 0.0
        %766 = vmatprep.subr.mxu0 0.0
        %767 = vmatpush2.msra.mxu0 0.0
        %768 = vmatprep.subr.mxu0 0.0
        %769 = vmatpush2.msra.mxu0 0.0
        %770 = vmatprep.subr.mxu0 0.0
        %771 = vmatpush2.msra.mxu0 0.0
        %772 = vmatprep.subr.mxu0 0.0
        %773 = vmatpush2.msra.mxu0 0.0
        %774 = vmatprep.subr.mxu0 0.0
        %775 = vmatpush2.msra.mxu0 0.0
        %776 = vmatprep.subr.mxu0 0.0
        %777 = vmatpush2.msra.mxu0 0.0
        %778 = vmatprep.subr.mxu0 0.0
        %779 = vmatpush2.msra.mxu0 0.0
        %780 = vmatprep.subr.mxu0 0.0
        %781 = vmatpush2.msra.mxu0 0.0
        %782 = vmatprep.subr.mxu0 0.0
        %783 = vmatpush2.msra.mxu0 0.0
        %784 = vmatprep.subr.mxu0 0.0
        %785 = vmatpush2.msra.mxu0 0.0
        %786 = vmatprep.subr.mxu0 0.0
        %787 = vmatpush2.msra.mxu0 0.0
        %788 = vmatprep.subr.mxu0 0.0
        %789 = vmatpush2.msra.mxu0 0.0
        %790 = vmatprep.subr.mxu0 0.0
        %791 = vmatpush2.msra.mxu0 0.0
        %792 = vmatprep.mubr.f32.mxu0 0.0
        %793 = vmatmul.mubr.f32.gmra.mxu0 %v696
        %v794 = vpop.f32.mrf.mxu0
        %v795 = vadd.f32 0.0, %v794
        %v796 = vpop.f32.mrf.mxu0
        %797 = vmatprep.mubr.f32.mxu0 0.0
        %798 = vmatmul.mubr.f32.gmra.mxu0 %v697
        %v799 = vpop.f32.mrf.mxu0
        %v800 = vadd.f32 0.0, %v799
        %v801 = vpop.f32.mrf.mxu0
        %802 = vmatprep.mubr.f32.mxu0 0.0
        %803 = vmatmul.mubr.f32.gmra.mxu0 %v698
        %v804 = vpop.f32.mrf.mxu0
        %v805 = vadd.f32 0.0, %v804
        %v806 = vpop.f32.mrf.mxu0
        %807 = vmatprep.mubr.f32.mxu0 0.0
        %808 = vmatmul.mubr.f32.gmra.mxu0 %v699
        %v809 = vpop.f32.mrf.mxu0
        %v810 = vadd.f32 0.0, %v809
        %v811 = vpop.f32.mrf.mxu0
        %812 = vmatprep.mubr.f32.mxu0 0.0
        %813 = vmatmul.mubr.f32.gmra.mxu0 %v700
        %v814 = vpop.f32.mrf.mxu0
        %v815 = vadd.f32 0.0, %v814
        %v816 = vpop.f32.mrf.mxu0
        %817 = vmatprep.mubr.f32.mxu0 0.0
        %818 = vmatmul.mubr.f32.gmra.mxu0 %v701
        %v819 = vpop.f32.mrf.mxu0
        %v820 = vadd.f32 0.0, %v819
        %v821 = vpop.f32.mrf.mxu0
        %822 = vmatprep.mubr.f32.mxu0 0.0
        %823 = vmatmul.mubr.f32.gmra.mxu0 %v702
        %v824 = vpop.f32.mrf.mxu0
        %v825 = vadd.f32 0.0, %v824
        %v826 = vpop.f32.mrf.mxu0
        %827 = vmatprep.mubr.f32.mxu0 0.0
        %828 = vmatmul.mubr.f32.gmra.mxu0 %v703
        %v829 = vpop.f32.mrf.mxu0
        %v830 = vadd.f32 0.0, %v829
        %v831 = vpop.f32.mrf.mxu0
        %832 = vmatprep.mubr.f32.mxu0 0.0
        %833 = vmatmul.mubr.f32.gmra.mxu0 %v704
        %v834 = vpop.f32.mrf.mxu0
        %v835 = vadd.f32 0.0, %v834
        %v836 = vpop.f32.mrf.mxu0
        %837 = vmatprep.mubr.f32.mxu0 0.0
        %838 = vmatmul.mubr.f32.gmra.mxu0 %v705
        %v839 = vpop.f32.mrf.mxu0
        %v840 = vadd.f32 0.0, %v839
        %v841 = vpop.f32.mrf.mxu0
        %842 = vmatprep.mubr.f32.mxu0 0.0
        %843 = vmatmul.mubr.f32.gmra.mxu0 %v706
        %v844 = vpop.f32.mrf.mxu0
        %v845 = vadd.f32 0.0, %v844
        %v846 = vpop.f32.mrf.mxu0
        %847 = vmatprep.mubr.f32.mxu0 0.0
        %848 = vmatmul.mubr.f32.gmra.mxu0 %v707
        %v849 = vpop.f32.mrf.mxu0
        %v850 = vadd.f32 0.0, %v849
        %v851 = vpop.f32.mrf.mxu0
        %852 = vmatprep.mubr.f32.mxu0 0.0
        %853 = vmatmul.mubr.f32.gmra.mxu0 %v708
        %v854 = vpop.f32.mrf.mxu0
        %v855 = vadd.f32 0.0, %v854
        %v856 = vpop.f32.mrf.mxu0
        %857 = vmatprep.mubr.f32.mxu0 0.0
        %858 = vmatmul.mubr.f32.gmra.mxu0 %v709
        %v859 = vpop.f32.mrf.mxu0
        %v860 = vadd.f32 0.0, %v859
        %v861 = vpop.f32.mrf.mxu0
        %862 = vmatprep.mubr.f32.mxu0 0.0
        %863 = vmatmul.mubr.f32.gmra.mxu0 %v710
        %v864 = vpop.f32.mrf.mxu0
        %v865 = vadd.f32 0.0, %v864
        %v866 = vpop.f32.mrf.mxu0
        %867 = vmatprep.mubr.f32.mxu0 0.0
        %868 = vmatmul.mubr.f32.gmra.mxu0 %v711
        %v869 = vpop.f32.mrf.mxu0
        %v870 = vadd.f32 0.0, %v869
        %v871 = vpop.f32.mrf.mxu0
        %872 = vdwg.mxu0
        %vm873 = vcmask 195584
        %v875 = vsel %vm873, %v677, 0
        %v878 = vsel %vm873, %v678, 0
        %v881 = vsel %vm873, %v679, 0
        %v884 = vsel %vm873, %v680, 0
        %v887 = vsel %vm873, %v681, 0
        %v890 = vsel %vm873, %v682, 0
        %v893 = vsel %vm873, %v683, 0
        %v896 = vsel %vm873, %v684, 0
        %v899 = vsel %vm873, %v685, 0
        %v902 = vsel %vm873, %v686, 0
        %v905 = vsel %vm873, %v687, 0
        %v908 = vsel %vm873, %v688, 0
        %v911 = vsel %vm873, %v689, 0
        %v914 = vsel %vm873, %v690, 0
        %v917 = vsel %vm873, %v691, 0
        %v920 = vsel %vm873, %v692, 0
        %922 = vmatprep.subr.mxu0 0.0
        %923 = vmatpush1.msra.mxu0 0.0
        %924 = vmatprep.subr.mxu0 0.0
        %925 = vmatpush1.msra.mxu0 0.0
        %926 = vmatprep.subr.mxu0 0.0
        %927 = vmatpush1.msra.mxu0 0.0
        %928 = vmatprep.subr.mxu0 0.0
        %929 = vmatpush1.msra.mxu0 0.0
        %930 = vmatprep.subr.mxu0 0.0
        %931 = vmatpush1.msra.mxu0 0.0
        %932 = vmatprep.subr.mxu0 0.0
        %933 = vmatpush1.msra.mxu0 0.0
        %934 = vmatprep.subr.mxu0 0.0
        %935 = vmatpush1.msra.mxu0 0.0
        %936 = vmatprep.subr.mxu0 0.0
        %937 = vmatpush1.msra.mxu0 0.0
        %938 = vmatprep.subr.mxu0 0.0
        %939 = vmatpush1.msra.mxu0 0.0
        %940 = vmatprep.subr.mxu0 0.0
        %941 = vmatpush1.msra.mxu0 0.0
        %942 = vmatprep.subr.mxu0 0.0
        %943 = vmatpush1.msra.mxu0 0.0
        %944 = vmatprep.subr.mxu0 0.0
        %945 = vmatpush1.msra.mxu0 0.0
        %946 = vmatprep.subr.mxu0 0.0
        %947 = vmatpush1.msra.mxu0 0.0
        %948 = vmatprep.subr.mxu0 0.0
        %949 = vmatpush1.msra.mxu0 %v695
        %950 = vmatprep.subr.mxu0 0.0
        %951 = vmatpush1.msra.mxu0 %v694
        %952 = vmatprep.subr.mxu0 0.0
        %953 = vmatpush1.msra.mxu0 %v693
        %954 = vmatprep.subr.mxu0 0.0
        %955 = vmatpush2.msra.mxu0 0.0
        %956 = vmatprep.subr.mxu0 0.0
        %957 = vmatpush2.msra.mxu0 0.0
        %958 = vmatprep.subr.mxu0 0.0
        %959 = vmatpush2.msra.mxu0 0.0
        %960 = vmatprep.subr.mxu0 0.0
        %961 = vmatpush2.msra.mxu0 0.0
        %962 = vmatprep.subr.mxu0 0.0
        %963 = vmatpush2.msra.mxu0 0.0
        %964 = vmatprep.subr.mxu0 0.0
        %965 = vmatpush2.msra.mxu0 0.0
        %966 = vmatprep.subr.mxu0 0.0
        %967 = vmatpush2.msra.mxu0 0.0
        %968 = vmatprep.subr.mxu0 0.0
        %969 = vmatpush2.msra.mxu0 0.0
        %970 = vmatprep.subr.mxu0 0.0
        %971 = vmatpush2.msra.mxu0 0.0
        %972 = vmatprep.subr.mxu0 0.0
        %973 = vmatpush2.msra.mxu0 0.0
        %974 = vmatprep.subr.mxu0 0.0
        %975 = vmatpush2.msra.mxu0 0.0
        %976 = vmatprep.subr.mxu0 0.0
        %977 = vmatpush2.msra.mxu0 0.0
        %978 = vmatprep.subr.mxu0 0.0
        %979 = vmatpush2.msra.mxu0 0.0
        %980 = vmatprep.subr.mxu0 0.0
        %981 = vmatpush2.msra.mxu0 0.0
        %982 = vmatprep.subr.mxu0 0.0
        %983 = vmatpush2.msra.mxu0 0.0
        %984 = vmatprep.subr.mxu0 0.0
        %985 = vmatpush2.msra.mxu0 0.0
        %986 = vmatprep.mubr.f32.mxu0 0.0
        %987 = vmatmul.mubr.f32.gmra.mxu0 %v875
        %v988 = vpop.f32.mrf.mxu0
        %v989 = vadd.f32 %v795, %v988
        %v990 = vpop.f32.mrf.mxu0
        %991 = vmatprep.mubr.f32.mxu0 0.0
        %992 = vmatmul.mubr.f32.gmra.mxu0 %v878
        %v993 = vpop.f32.mrf.mxu0
        %v994 = vadd.f32 %v800, %v993
        %v995 = vpop.f32.mrf.mxu0
        %996 = vmatprep.mubr.f32.mxu0 0.0
        %997 = vmatmul.mubr.f32.gmra.mxu0 %v881
        %v998 = vpop.f32.mrf.mxu0
        %v999 = vadd.f32 %v805, %v998
        %v1000 = vpop.f32.mrf.mxu0
        %1001 = vmatprep.mubr.f32.mxu0 0.0
        %1002 = vmatmul.mubr.f32.gmra.mxu0 %v884
        %v1003 = vpop.f32.mrf.mxu0
        %v1004 = vadd.f32 %v810, %v1003
        %v1005 = vpop.f32.mrf.mxu0
        %1006 = vmatprep.mubr.f32.mxu0 0.0
        %1007 = vmatmul.mubr.f32.gmra.mxu0 %v887
        %v1008 = vpop.f32.mrf.mxu0
        %v1009 = vadd.f32 %v815, %v1008
        %v1010 = vpop.f32.mrf.mxu0
        %1011 = vmatprep.mubr.f32.mxu0 0.0
        %1012 = vmatmul.mubr.f32.gmra.mxu0 %v890
        %v1013 = vpop.f32.mrf.mxu0
        %v1014 = vadd.f32 %v820, %v1013
        %v1015 = vpop.f32.mrf.mxu0
        %1016 = vmatprep.mubr.f32.mxu0 0.0
        %1017 = vmatmul.mubr.f32.gmra.mxu0 %v893
        %v1018 = vpop.f32.mrf.mxu0
        %v1019 = vadd.f32 %v825, %v1018
        %v1020 = vpop.f32.mrf.mxu0
        %1021 = vmatprep.mubr.f32.mxu0 0.0
        %1022 = vmatmul.mubr.f32.gmra.mxu0 %v896
        %v1023 = vpop.f32.mrf.mxu0
        %v1024 = vadd.f32 %v830, %v1023
        %v1025 = vpop.f32.mrf.mxu0
        %1026 = vmatprep.mubr.f32.mxu0 0.0
        %1027 = vmatmul.mubr.f32.gmra.mxu0 %v899
        %v1028 = vpop.f32.mrf.mxu0
        %v1029 = vadd.f32 %v835, %v1028
        %v1030 = vpop.f32.mrf.mxu0
        %1031 = vmatprep.mubr.f32.mxu0 0.0
        %1032 = vmatmul.mubr.f32.gmra.mxu0 %v902
        %v1033 = vpop.f32.mrf.mxu0
        %v1034 = vadd.f32 %v840, %v1033
        %v1035 = vpop.f32.mrf.mxu0
        %1036 = vmatprep.mubr.f32.mxu0 0.0
        %1037 = vmatmul.mubr.f32.gmra.mxu0 %v905
        %v1038 = vpop.f32.mrf.mxu0
        %v1039 = vadd.f32 %v845, %v1038
        %v1040 = vpop.f32.mrf.mxu0
        %1041 = vmatprep.mubr.f32.mxu0 0.0
        %1042 = vmatmul.mubr.f32.gmra.mxu0 %v908
        %v1043 = vpop.f32.mrf.mxu0
        %v1044 = vadd.f32 %v850, %v1043
        %v1045 = vpop.f32.mrf.mxu0
        %1046 = vmatprep.mubr.f32.mxu0 0.0
        %1047 = vmatmul.mubr.f32.gmra.mxu0 %v911
        %v1048 = vpop.f32.mrf.mxu0
        %v1049 = vadd.f32 %v855, %v1048
        %v1050 = vpop.f32.mrf.mxu0
        %1051 = vmatprep.mubr.f32.mxu0 0.0
        %1052 = vmatmul.mubr.f32.gmra.mxu0 %v914
        %v1053 = vpop.f32.mrf.mxu0
        %v1054 = vadd.f32 %v860, %v1053
        %v1055 = vpop.f32.mrf.mxu0
        %1056 = vmatprep.mubr.f32.mxu0 0.0
        %1057 = vmatmul.mubr.f32.gmra.mxu0 %v917
        %v1058 = vpop.f32.mrf.mxu0
        %v1059 = vadd.f32 %v865, %v1058
        %v1060 = vpop.f32.mrf.mxu0
        %1061 = vmatprep.mubr.f32.mxu0 0.0
        %1062 = vmatmul.mubr.f32.gmra.mxu0 %v920
        %v1063 = vpop.f32.mrf.mxu0
        %v1064 = vadd.f32 %v870, %v1063
        %v1065 = vpop.f32.mrf.mxu0
        %1066 = vdwg.mxu0
        %v1067 = vld [vmem:[%s7] sm:$0x1]
        %v1069 = vlaneseq
        %v1070 = vshrl.u32 %v1069, 7
        %v1071 = vsub.s32 0, %v1070
        %v1072 = vrot.slane %v1067, %v1071
        %v1074 = vadd.f32 %v989, %v1072
        %v1075 = vadd.f32 %v994, %v1072
        %v1076 = vadd.f32 %v999, %v1072
        %v1077 = vadd.f32 %v1004, %v1072
        %v1078 = vadd.f32 %v1009, %v1072
        %v1079 = vadd.f32 %v1014, %v1072
        %v1080 = vadd.f32 %v1019, %v1072
        %v1081 = vadd.f32 %v1024, %v1072
        %v1082 = vadd.f32 %v1029, %v1072
        %v1083 = vadd.f32 %v1034, %v1072
        %v1084 = vadd.f32 %v1039, %v1072
        %v1085 = vadd.f32 %v1044, %v1072
        %v1086 = vadd.f32 %v1049, %v1072
        %v1087 = vadd.f32 %v1054, %v1072
        %v1088 = vadd.f32 %v1059, %v1072
        %v1089 = vadd.f32 %v1064, %v1072
        %v1090 = vmax.f32 %v1074, 0.0
        %v1091 = vmax.f32 %v1075, 0.0
        %v1092 = vmax.f32 %v1076, 0.0
        %v1093 = vmax.f32 %v1077, 0.0
        %v1094 = vmax.f32 %v1078, 0.0
        %v1095 = vmax.f32 %v1079, 0.0
        %v1096 = vmax.f32 %v1080, 0.0
        %v1097 = vmax.f32 %v1081, 0.0
        %v1098 = vmax.f32 %v1082, 0.0
        %v1099 = vmax.f32 %v1083, 0.0
        %v1100 = vmax.f32 %v1084, 0.0
        %v1101 = vmax.f32 %v1085, 0.0
        %v1102 = vmax.f32 %v1086, 0.0
        %v1103 = vmax.f32 %v1087, 0.0
        %v1104 = vmax.f32 %v1088, 0.0
        %v1105 = vmax.f32 %v1089, 0.0
        %v1106 = vld [vmem:[%s463] sm:$0x1]
        %v1107 = vlaneseq
        %v1108 = vshrl.u32 %v1107, 7
        %v1109 = vadd.s32 %v1108, 8
        %v1110 = vadd.s32 %v1108, 16
        %v1111 = vlaneseq
        %v1112 = vshrl.u32 %v1111, 7
        %v1113 = vsub.s32 0, %v1112
        %v1114 = vrot.slane %v1106, %v1113
        %vm1115 = vcmp.eq.s32.totalorder %v1108, %v1114
        %vm1116 = vcmp.eq.s32.totalorder %v1109, %v1114
        %vm1117 = vcmp.eq.s32.totalorder %v1110, %v1114
        %v1118 = vsel %vm1115, 1, 0
        %v1119 = vsel %vm1116, 1, 0
        %v1120 = vsel %vm1117, 1, 0
        %v1121 = vcvt.s32.f32 %v1118
        %v1122 = vcvt.s32.f32 %v1119
        %v1123 = vcvt.s32.f32 %v1120
        %v1124 = vld [vmem:[#allocation2] sm:$0xff]
        %v1125 = vld [vmem:[#allocation2 + $0x8] sm:$0xff]
        %v1126 = vld [vmem:[#allocation2 + $0x10] sm:$0xff]
        %1127 = vmatprep.subr.mxu0 0.0
        %1128 = vmatpush1.msra.mxu0 %v1105
        %1129 = vmatprep.subr.mxu0 0.0
        %1130 = vmatpush1.msra.mxu0 %v1104
        %1131 = vmatprep.subr.mxu0 0.0
        %1132 = vmatpush1.msra.mxu0 %v1103
        %1133 = vmatprep.subr.mxu0 0.0
        %1134 = vmatpush1.msra.mxu0 %v1102
        %1135 = vmatprep.subr.mxu0 0.0
        %1136 = vmatpush1.msra.mxu0 %v1101
        %1137 = vmatprep.subr.mxu0 0.0
        %1138 = vmatpush1.msra.mxu0 %v1100
        %1139 = vmatprep.subr.mxu0 0.0
        %1140 = vmatpush1.msra.mxu0 %v1099
        %1141 = vmatprep.subr.mxu0 0.0
        %1142 = vmatpush1.msra.mxu0 %v1098
        %1143 = vmatprep.subr.mxu0 0.0
        %1144 = vmatpush1.msra.mxu0 %v1097
        %1145 = vmatprep.subr.mxu0 0.0
        %1146 = vmatpush1.msra.mxu0 %v1096
        %1147 = vmatprep.subr.mxu0 0.0
        %1148 = vmatpush1.msra.mxu0 %v1095
        %1149 = vmatprep.subr.mxu0 0.0
        %1150 = vmatpush1.msra.mxu0 %v1094
        %1151 = vmatprep.subr.mxu0 0.0
        %1152 = vmatpush1.msra.mxu0 %v1093
        %1153 = vmatprep.subr.mxu0 0.0
        %1154 = vmatpush1.msra.mxu0 %v1092
        %1155 = vmatprep.subr.mxu0 0.0
        %1156 = vmatpush1.msra.mxu0 %v1091
        %1157 = vmatprep.subr.mxu0 0.0
        %1158 = vmatpush1.msra.mxu0 %v1090
        %1159 = vmatprep.subr.mxu0 0.0
        %1160 = vmatpush2.msra.mxu0 0.0
        %1161 = vmatprep.subr.mxu0 0.0
        %1162 = vmatpush2.msra.mxu0 0.0
        %1163 = vmatprep.subr.mxu0 0.0
        %1164 = vmatpush2.msra.mxu0 0.0
        %1165 = vmatprep.subr.mxu0 0.0
        %1166 = vmatpush2.msra.mxu0 0.0
        %1167 = vmatprep.subr.mxu0 0.0
        %1168 = vmatpush2.msra.mxu0 0.0
        %1169 = vmatprep.subr.mxu0 0.0
        %1170 = vmatpush2.msra.mxu0 0.0
        %1171 = vmatprep.subr.mxu0 0.0
        %1172 = vmatpush2.msra.mxu0 0.0
        %1173 = vmatprep.subr.mxu0 0.0
        %1174 = vmatpush2.msra.mxu0 0.0
        %1175 = vmatprep.subr.mxu0 0.0
        %1176 = vmatpush2.msra.mxu0 0.0
        %1177 = vmatprep.subr.mxu0 0.0
        %1178 = vmatpush2.msra.mxu0 0.0
        %1179 = vmatprep.subr.mxu0 0.0
        %1180 = vmatpush2.msra.mxu0 0.0
        %1181 = vmatprep.subr.mxu0 0.0
        %1182 = vmatpush2.msra.mxu0 0.0
        %1183 = vmatprep.subr.mxu0 0.0
        %1184 = vmatpush2.msra.mxu0 0.0
        %1185 = vmatprep.subr.mxu0 0.0
        %1186 = vmatpush2.msra.mxu0 0.0
        %1187 = vmatprep.subr.mxu0 0.0
        %1188 = vmatpush2.msra.mxu0 0.0
        %1189 = vmatprep.subr.mxu0 0.0
        %1190 = vmatpush2.msra.mxu0 0.0
        %1191 = vmatprep.mubr.f32.mxu0 0.0
        %1192 = vmatmul.mubr.f32.gmra.mxu0 %v1121
        %v1193 = vpop.f32.mrf.mxu0
        %v1194 = vadd.f32 0.0, %v1193
        %v1195 = vpop.f32.mrf.mxu0
        %1196 = vmatprep.mubr.f32.mxu0 0.0
        %1197 = vmatmul.mubr.f32.gmra.mxu0 %v1122
        %v1198 = vpop.f32.mrf.mxu0
        %v1199 = vadd.f32 0.0, %v1198
        %v1200 = vpop.f32.mrf.mxu0
        %1201 = vmatprep.mubr.f32.mxu0 0.0
        %1202 = vmatmul.mubr.f32.gmra.mxu0 %v1123
        %v1203 = vpop.f32.mrf.mxu0
        %v1204 = vadd.f32 0.0, %v1203
        %v1205 = vpop.f32.mrf.mxu0
        %1206 = vdwg.mxu0
        %v1207 = vadd.f32 %v1124, %v1194
        %v1208 = vadd.f32 %v1125, %v1199
        %v1209 = vadd.f32 %v1126, %v1204
        %1210 = vst [vmem:[#allocation2] sm:$0xff] %v1207
        %1211 = vst [vmem:[#allocation2 + $0x8] sm:$0xff] %v1208
        %1212 = vst [vmem:[#allocation2 + $0x10] sm:$0xff] %v1209
        %p1213 = scmp.eq.s32.totalorder %s26, 2
        // Predicated region
        $region85: #{tpu_custom_call.1} parent=63 // pred_check
          %p1214 = pneg %p1213
        $region86: #{tpu_custom_call.1} parent=63 // pred_check_branch
          %1216 = sbr.rel (%p1214) target = $region88
        $region87: #{tpu_custom_call.1} parent=63 // pred_region
          %v1217 = vld [vmem:[#allocation2] sm:$0xff]
          %v1218 = vld [vmem:[#allocation2 + $0x8] sm:$0xff]
          %v1219 = vld [vmem:[#allocation2 + $0x10] sm:$0xff]
          %v1220 = vld [vmem:[%s4] sm:$0xff]
          %v1221 = vld [vmem:[%s4 + $0x8] sm:$0xff]
          %v1222 = vld [vmem:[%s4 + $0x10] sm:$0xff]
          %1224 = vset.pattern.permute.xlu0 0
          %1225 = vperm.xlu0 %1224, %v1220
          %v1226 = vpop.permute.xlu0 %1225
          %1229 = vset.pattern.permute.xlu0 0
          %1230 = vperm.xlu0 %1229, %v1221
          %v1231 = vpop.permute.xlu0 %1230
          %1234 = vset.pattern.permute.xlu0 0
          %1235 = vperm.xlu0 %1234, %v1222
          %v1236 = vpop.permute.xlu0 %1235
          %v1238 = vmul.f32 %v1217, %v1226
          %v1239 = vmul.f32 %v1218, %v1231
          %v1240 = vmul.f32 %v1219, %v1236
          %v1241 = vld [vmem:[%s2] sm:$0xff]
          %v1242 = vld [vmem:[%s2 + $0x8] sm:$0xff]
          %v1243 = vld [vmem:[%s2 + $0x10] sm:$0xff]
          %v1244 = vld [vmem:[#allocation9] sm:$0xff]
          %v1245 = vld [vmem:[#allocation9 + $0x8] sm:$0xff]
          %v1246 = vld [vmem:[#allocation9 + $0x10] sm:$0xff]
          %v1247 = vld [vmem:[#allocation9 + $0x18] sm:$0xff]
          %v1248 = vld [vmem:[#allocation9 + $0x20] sm:$0xff]
          %v1249 = vld [vmem:[#allocation9 + $0x28] sm:$0xff]
          %v1250 = vld [vmem:[#allocation9 + $0x30] sm:$0xff]
          %v1251 = vld [vmem:[#allocation9 + $0x38] sm:$0xff]
          %v1252 = vld [vmem:[#allocation9 + $0x40] sm:$0xff]
          %v1253 = vld [vmem:[#allocation9 + $0x48] sm:$0xff]
          %v1254 = vld [vmem:[#allocation9 + $0x50] sm:$0xff]
          %v1255 = vld [vmem:[#allocation9 + $0x58] sm:$0xff]
          %v1256 = vld [vmem:[#allocation9 + $0x60] sm:$0xff]
          %v1257 = vld [vmem:[#allocation9 + $0x68] sm:$0xff]
          %v1258 = vld [vmem:[#allocation9 + $0x70] sm:$0xff]
          %v1259 = vld [vmem:[#allocation9 + $0x78] sm:$0xff]
          %v1260 = vld [vmem:[#allocation10] sm:$0xff]
          %v1261 = vld [vmem:[#allocation10 + $0x8] sm:$0xff]
          %v1262 = vld [vmem:[#allocation10 + $0x10] sm:$0xff]
          %v1263 = vld [vmem:[#allocation10 + $0x18] sm:$0xff]
          %v1264 = vld [vmem:[#allocation10 + $0x20] sm:$0xff]
          %v1265 = vld [vmem:[#allocation10 + $0x28] sm:$0xff]
          %v1266 = vld [vmem:[#allocation10 + $0x30] sm:$0xff]
          %v1267 = vld [vmem:[#allocation10 + $0x38] sm:$0xff]
          %v1268 = vld [vmem:[#allocation10 + $0x40] sm:$0xff]
          %v1269 = vld [vmem:[#allocation10 + $0x48] sm:$0xff]
          %v1270 = vld [vmem:[#allocation10 + $0x50] sm:$0xff]
          %v1271 = vld [vmem:[#allocation10 + $0x58] sm:$0xff]
          %v1272 = vld [vmem:[#allocation10 + $0x60] sm:$0xff]
          %v1273 = vld [vmem:[#allocation10 + $0x68] sm:$0xff]
          %v1274 = vld [vmem:[#allocation10 + $0x70] sm:$0xff]
          %v1275 = vld [vmem:[#allocation10 + $0x78] sm:$0xff]
          %1276 = vmatprep.subr.mxu0 0.0
          %1277 = vmatpush1.msra.mxu0 %v1275
          %1278 = vmatprep.subr.mxu0 0.0
          %1279 = vmatpush1.msra.mxu0 %v1274
          %1280 = vmatprep.subr.mxu0 0.0
          %1281 = vmatpush1.msra.mxu0 %v1273
          %1282 = vmatprep.subr.mxu0 0.0
          %1283 = vmatpush1.msra.mxu0 %v1272
          %1284 = vmatprep.subr.mxu0 0.0
          %1285 = vmatpush1.msra.mxu0 %v1271
          %1286 = vmatprep.subr.mxu0 0.0
          %1287 = vmatpush1.msra.mxu0 %v1270
          %1288 = vmatprep.subr.mxu0 0.0
          %1289 = vmatpush1.msra.mxu0 %v1269
          %1290 = vmatprep.subr.mxu0 0.0
          %1291 = vmatpush1.msra.mxu0 %v1268
          %1292 = vmatprep.subr.mxu0 0.0
          %1293 = vmatpush1.msra.mxu0 %v1267
          %1294 = vmatprep.subr.mxu0 0.0
          %1295 = vmatpush1.msra.mxu0 %v1266
          %1296 = vmatprep.subr.mxu0 0.0
          %1297 = vmatpush1.msra.mxu0 %v1265
          %1298 = vmatprep.subr.mxu0 0.0
          %1299 = vmatpush1.msra.mxu0 %v1264
          %1300 = vmatprep.subr.mxu0 0.0
          %1301 = vmatpush1.msra.mxu0 %v1263
          %1302 = vmatprep.subr.mxu0 0.0
          %1303 = vmatpush1.msra.mxu0 %v1262
          %1304 = vmatprep.subr.mxu0 0.0
          %1305 = vmatpush1.msra.mxu0 %v1261
          %1306 = vmatprep.subr.mxu0 0.0
          %1307 = vmatpush1.msra.mxu0 %v1260
          %1308 = vmatprep.subr.mxu0 0.0
          %1309 = vmatpush2.msra.mxu0 0.0
          %1310 = vmatprep.subr.mxu0 0.0
          %1311 = vmatpush2.msra.mxu0 0.0
          %1312 = vmatprep.subr.mxu0 0.0
          %1313 = vmatpush2.msra.mxu0 0.0
          %1314 = vmatprep.subr.mxu0 0.0
          %1315 = vmatpush2.msra.mxu0 0.0
          %1316 = vmatprep.subr.mxu0 0.0
          %1317 = vmatpush2.msra.mxu0 0.0
          %1318 = vmatprep.subr.mxu0 0.0
          %1319 = vmatpush2.msra.mxu0 0.0
          %1320 = vmatprep.subr.mxu0 0.0
          %1321 = vmatpush2.msra.mxu0 0.0
          %1322 = vmatprep.subr.mxu0 0.0
          %1323 = vmatpush2.msra.mxu0 0.0
          %1324 = vmatprep.subr.mxu0 0.0
          %1325 = vmatpush2.msra.mxu0 0.0
          %1326 = vmatprep.subr.mxu0 0.0
          %1327 = vmatpush2.msra.mxu0 0.0
          %1328 = vmatprep.subr.mxu0 0.0
          %1329 = vmatpush2.msra.mxu0 0.0
          %1330 = vmatprep.subr.mxu0 0.0
          %1331 = vmatpush2.msra.mxu0 0.0
          %1332 = vmatprep.subr.mxu0 0.0
          %1333 = vmatpush2.msra.mxu0 0.0
          %1334 = vmatprep.subr.mxu0 0.0
          %1335 = vmatpush2.msra.mxu0 0.0
          %1336 = vmatprep.subr.mxu0 0.0
          %1337 = vmatpush2.msra.mxu0 0.0
          %1338 = vmatprep.subr.mxu0 0.0
          %1339 = vmatpush2.msra.mxu0 0.0
          %1340 = vmatprep.mubr.f32.mxu0 0.0
          %1341 = vmatmul.mubr.f32.gmra.mxu0 %v1238
          %v1342 = vpop.f32.mrf.mxu0
          %v1343 = vadd.f32 0.0, %v1342
          %v1344 = vpop.f32.mrf.mxu0
          %1345 = vmatprep.mubr.f32.mxu0 0.0
          %1346 = vmatmul.mubr.f32.gmra.mxu0 %v1239
          %v1347 = vpop.f32.mrf.mxu0
          %v1348 = vadd.f32 0.0, %v1347
          %v1349 = vpop.f32.mrf.mxu0
          %1350 = vmatprep.mubr.f32.mxu0 0.0
          %1351 = vmatmul.mubr.f32.gmra.mxu0 %v1240
          %v1352 = vpop.f32.mrf.mxu0
          %v1353 = vadd.f32 0.0, %v1352
          %v1354 = vpop.f32.mrf.mxu0
          %1355 = vdwg.mxu0
          %1356 = vmatprep.subr.mxu0 0.0
          %1357 = vmatpush1.msra.mxu0 %v1259
          %1358 = vmatprep.subr.mxu0 0.0
          %1359 = vmatpush1.msra.mxu0 %v1258
          %1360 = vmatprep.subr.mxu0 0.0
          %1361 = vmatpush1.msra.mxu0 %v1257
          %1362 = vmatprep.subr.mxu0 0.0
          %1363 = vmatpush1.msra.mxu0 %v1256
          %1364 = vmatprep.subr.mxu0 0.0
          %1365 = vmatpush1.msra.mxu0 %v1255
          %1366 = vmatprep.subr.mxu0 0.0
          %1367 = vmatpush1.msra.mxu0 %v1254
          %1368 = vmatprep.subr.mxu0 0.0
          %1369 = vmatpush1.msra.mxu0 %v1253
          %1370 = vmatprep.subr.mxu0 0.0
          %1371 = vmatpush1.msra.mxu0 %v1252
          %1372 = vmatprep.subr.mxu0 0.0
          %1373 = vmatpush1.msra.mxu0 %v1251
          %1374 = vmatprep.subr.mxu0 0.0
          %1375 = vmatpush1.msra.mxu0 %v1250
          %1376 = vmatprep.subr.mxu0 0.0
          %1377 = vmatpush1.msra.mxu0 %v1249
          %1378 = vmatprep.subr.mxu0 0.0
          %1379 = vmatpush1.msra.mxu0 %v1248
          %1380 = vmatprep.subr.mxu0 0.0
          %1381 = vmatpush1.msra.mxu0 %v1247
          %1382 = vmatprep.subr.mxu0 0.0
          %1383 = vmatpush1.msra.mxu0 %v1246
          %1384 = vmatprep.subr.mxu0 0.0
          %1385 = vmatpush1.msra.mxu0 %v1245
          %1386 = vmatprep.subr.mxu0 0.0
          %1387 = vmatpush1.msra.mxu0 %v1244
          %1388 = vmatprep.subr.mxu0 0.0
          %1389 = vmatpush2.msra.mxu0 0.0
          %1390 = vmatprep.subr.mxu0 0.0
          %1391 = vmatpush2.msra.mxu0 0.0
          %1392 = vmatprep.subr.mxu0 0.0
          %1393 = vmatpush2.msra.mxu0 0.0
          %1394 = vmatprep.subr.mxu0 0.0
          %1395 = vmatpush2.msra.mxu0 0.0
          %1396 = vmatprep.subr.mxu0 0.0
          %1397 = vmatpush2.msra.mxu0 0.0
          %1398 = vmatprep.subr.mxu0 0.0
          %1399 = vmatpush2.msra.mxu0 0.0
          %1400 = vmatprep.subr.mxu0 0.0
          %1401 = vmatpush2.msra.mxu0 0.0
          %1402 = vmatprep.subr.mxu0 0.0
          %1403 = vmatpush2.msra.mxu0 0.0
          %1404 = vmatprep.subr.mxu0 0.0
          %1405 = vmatpush2.msra.mxu0 0.0
          %1406 = vmatprep.subr.mxu0 0.0
          %1407 = vmatpush2.msra.mxu0 0.0
          %1408 = vmatprep.subr.mxu0 0.0
          %1409 = vmatpush2.msra.mxu0 0.0
          %1410 = vmatprep.subr.mxu0 0.0
          %1411 = vmatpush2.msra.mxu0 0.0
          %1412 = vmatprep.subr.mxu0 0.0
          %1413 = vmatpush2.msra.mxu0 0.0
          %1414 = vmatprep.subr.mxu0 0.0
          %1415 = vmatpush2.msra.mxu0 0.0
          %1416 = vmatprep.subr.mxu0 0.0
          %1417 = vmatpush2.msra.mxu0 0.0
          %1418 = vmatprep.subr.mxu0 0.0
          %1419 = vmatpush2.msra.mxu0 0.0
          %1420 = vmatprep.mubr.f32.mxu0 0.0
          %1421 = vmatmul.mubr.f32.gmra.mxu0 %v1241
          %v1422 = vpop.f32.mrf.mxu0
          %v1423 = vadd.f32 %v1343, %v1422
          %v1424 = vpop.f32.mrf.mxu0
          %1425 = vmatprep.mubr.f32.mxu0 0.0
          %1426 = vmatmul.mubr.f32.gmra.mxu0 %v1242
          %v1427 = vpop.f32.mrf.mxu0
          %v1428 = vadd.f32 %v1348, %v1427
          %v1429 = vpop.f32.mrf.mxu0
          %1430 = vmatprep.mubr.f32.mxu0 0.0
          %1431 = vmatmul.mubr.f32.gmra.mxu0 %v1243
          %v1432 = vpop.f32.mrf.mxu0
          %v1433 = vadd.f32 %v1353, %v1432
          %v1434 = vpop.f32.mrf.mxu0
          %1435 = vdwg.mxu0
          %v1436 = vld [vmem:[%s10] sm:$0x1]
          %v1438 = vlaneseq
          %v1439 = vshrl.u32 %v1438, 7
          %v1440 = vsub.s32 0, %v1439
          %v1441 = vrot.slane %v1436, %v1440
          %v1443 = vadd.f32 %v1423, %v1441
          %v1444 = vadd.f32 %v1428, %v1441
          %v1445 = vadd.f32 %v1433, %v1441
          %v1446 = vmax.f32 %v1443, 0.0
          %v1447 = vmax.f32 %v1444, 0.0
          %v1448 = vmax.f32 %v1445, 0.0
          %1449 = vst [vmem:[#allocation12] sm:$0xff] %v1446
          %1450 = vst [vmem:[#allocation12 + $0x8] sm:$0xff] %v1447
          %1451 = vst [vmem:[#allocation12 + $0x10] sm:$0xff] %v1448
        $region88: #{tpu_custom_call.1} parent=63 // pred_fallthru
          _
        // Predicated region
        $region89: #{tpu_custom_call.1} parent=63 // pred_check
          %p1452 = pneg %p285
        $region90: #{tpu_custom_call.1} parent=63 // pred_check_branch
          %1454 = sbr.rel (%p1452) target = $region92
        $region91: #{tpu_custom_call.1} parent=63 // pred_region
          %s1456 = ssub.s32 384, 384
          %1457 = vsyncadd [#allocation6], %s1456
          %s1458 = sshll.u32 [#allocation12], 4
          %s1459 = int_to_ptr.vmem [resolvable:$true] %s1458
          %1464 = dma.vmem_to_hbm [thread:$0]  %s1459, 384, %s11, [#allocation6], 128, 128, 8
        $region92: #{tpu_custom_call.1} parent=63 // pred_fallthru
          _
        // Predicated region
        $region93: #{tpu_custom_call.1} parent=63 // pred_check
          %p1465 = pneg %p285
        $region94: #{tpu_custom_call.1} parent=63 // pred_check_branch
          %1467 = sbr.rel (%p1465) target = $region96
        $region95: #{tpu_custom_call.1} parent=63 // pred_region
          %1468 = dma.done [#allocation6], 384
        $region96: #{tpu_custom_call.1} parent=63 // pred_fallthru
          _
      $region64: #{tpu_custom_call.1} parent=5 // pred_fallthru
        _
      %p1469 = scmp.le.s32.totalorder 2, %s21
      // Predicated region
      $region97: #{tpu_custom_call.1} parent=5 // pred_check
        %p1470 = pneg %p1469
      $region98: #{tpu_custom_call.1} parent=5 // pred_check_branch
        %1472 = sbr.rel (%p1470) target = $region100
      $region99: #{tpu_custom_call.1} parent=5 // pred_region
        %s1473 = ssub.s32 %s21, 2
      $region100: #{tpu_custom_call.1} parent=5 // pred_fallthru
        _
    $region6: #{tpu_custom_call.1} parent=1 // loop_footer
      %s25 = sadd.s32 1, %s21
    $region7: #{tpu_custom_call.1} parent=1 // loop_footer_branch
      %20 = sbr.rel target = $region3
    $region8: #{tpu_custom_call.1} parent=1 // loop_exit
      _
    %1474 = vsyncpa [#allocation5], 1
    %s1475 = scalar_lea.sflag [#allocation5], 1
    %1476 = vsyncpa %s1475, 1
    %1477 = vsyncpa [#allocation8], 1
    %1478 = vsyncpa [#allocation11], 1
    %1479 = vsyncpa [#allocation6], 1
    %s1480 = scalar_lea.sflag [#allocation6], 1
    %1481 = vsyncpa %s1480, 1

</llo_original>
